<compile_context>
chip_gen: v6e
topology: v6e:2x2x1
jax: 0.10.0
libtpu: 0.0.40
codegen_flags: <defaults>
</compile_context>

<pallas_src>
import jax
import jax.numpy as jnp
from jax.experimental import pallas as pl
from jax.experimental.pallas import tpu as pltpu

# ---- small synthetic config ----
BATCH = 2
C_IN = 4
H = W = 16
K = 3                      # conv kernel, padding=1, stride=1 ("SAME")
FEAT_DIM = 16              # backbone feature dim (== encoder.fc.weight.shape[1])
PROJ_HIDDEN = 32           # projector_hidden_dim
OUT_DIM = 16               # output_dim
PRED_HIDDEN = 8            # predictor_hidden_dim
BN_EPS = 1e-5
COS_EPS = 1e-8

LANE = 128                             # pad every feature dim to lane width
MAT_NAMES = ("conv_w_col", "pw1", "pw2", "pw3", "qw1", "qw2")
VEC_NAMES = ("conv_b", "pb1", "pg1", "pt1", "pb2", "pg2", "pt2",
             "pb3", "pg3", "pt3", "qb1", "qg1", "qt1", "qb2")
N_MATS = len(MAT_NAMES)                # 6 weight matrices -> 6*128 slab rows
VEC_ROWS = 16                          # 14 vector rows, padded to sublane mult
VEC_BASE = N_MATS * LANE               # 768
SLAB_ROWS = VEC_BASE + VEC_ROWS        # 784 (multiple of 8)
NB = 2 * BATCH                         # stacked (view, batch) feature rows
CHUNK = H * W                          # 256 im2col rows per (view, batch) group
N_CHUNKS = NB                          # 4 grid steps


# --------------------------------------------------------------------------
# Fused kernel: backbone (chunked, pipelined) + projector + predictor + loss.
# --------------------------------------------------------------------------
def simsiam_kernel(xcol_ref, slab_ref, loss_ref, feats_ref):
    step = pl.program_id(0)

    # ---------------- per-step backbone: conv-as-matmul + ReLU + pool -------
    @pl.when(step == 0)
    def _():
        feats_ref[...] = jnp.zeros_like(feats_ref)

    conv_w = slab_ref[0:LANE, :]                         # (128, 128)
    conv_b = slab_ref[VEC_BASE:VEC_BASE + 1, :]          # (1, 128)

    y = jnp.dot(xcol_ref[...], conv_w, preferred_element_type=jnp.float32)
    y = jnp.maximum(y + conv_b, 0.0)                     # (256, 128)
    # global-average-pool of this (view, batch) group: plain row mean (no MXU)
    pooled = jnp.sum(y, axis=0, keepdims=True) * (1.0 / (H * W))   # (1, 128)

    row = jax.lax.broadcasted_iota(jnp.int32, (NB, 1), 0)           # (4, 1)
    feats_ref[...] += jnp.where(row == step, pooled, 0.0)

    # ---------------- final step: projector + predictor + loss --------------
    @pl.when(step == N_CHUNKS - 1)
    def _():
        def mat(i):
            return slab_ref[i * LANE:(i + 1) * LANE, :]             # (128, 128)

        vecs = slab_ref[VEC_BASE:VEC_BASE + VEC_ROWS, :]            # (16, 128)

        def vec(i):
            return vecs[i:i + 1, :]                                 # (1, 128)

        pw1, pw2, pw3, qw1, qw2 = (mat(i) for i in range(1, N_MATS))
        (pb1, pg1, pt1, pb2, pg2, pt2,
         pb3, pg3, pt3, qb1, qg1, qt1, qb2) = (
            vec(i) for i in range(1, len(VEC_NAMES)))

        feats = feats_ref[...]                                      # (4, 128)
        # row order: [view1 b0, view1 b1, view2 b0, view2 b1]
        even = (row % 2) == 0                                       # (4, 1)

        def pair_partner(x):
            # partner of row r is r^1: sublane roll +/-1, pick by row parity
            # (VPU/XLU only -- no BN-stat matmuls on the MXU).
            return jnp.where(even,
                             jnp.roll(x, -1, axis=0),
                             jnp.roll(x, 1, axis=0))

        def linear(x, w, b):
            return jnp.dot(x, w, preferred_element_type=jnp.float32) + b

        def bn(x, g, t):
            # BatchNorm1d training mode, per-view batch of 2 (exact pairwise)
            mu = 0.5 * (x + pair_partner(x))
            d = x - mu
            return d * jax.lax.rsqrt(d * d + BN_EPS) * g + t        # var=(x-mu)^2

        # projector (encoder.fc): both views share the Linears -> single matmuls
        h = jnp.maximum(bn(linear(feats, pw1, pb1), pg1, pt1), 0.0)
        h = jnp.maximum(bn(linear(h, pw2, pb2), pg2, pt2), 0.0)
        z = bn(linear(h, pw3, pb3), pg3, pt3)                       # (4, 128)

        # predictor
        h = jnp.maximum(bn(linear(z, qw1, qb1), qg1, qt1), 0.0)
        p = linear(h, qw2, qb2)                                     # (4, 128)

        # Symmetric negative cosine similarity.  Rows of p are [p1; p2];
        # roll(z, BATCH) gives [z2; z1] (z.detach() is a forward-value no-op).
        z_sw = jnp.roll(z, BATCH, axis=0)
        pz = jnp.sum(p * z_sw, axis=-1, keepdims=True)              # (4, 1)
        pn2 = jnp.sum(p * p, axis=-1, keepdims=True)
        zn2 = jnp.sum(z_sw * z_sw, axis=-1, keepdims=True)
        # PyTorch clamps the norm product by eps -> min(rsqrt(.), 1/eps)
        inv = jnp.minimum(jax.lax.rsqrt(pn2 * zn2), 1.0 / COS_EPS)
        cos = pz * inv
        # L = D(p1,z2)/2 + D(p2,z1)/2 = -mean over all 2B rows of cos
        loss_ref[0, 0] = -jnp.sum(cos) * (1.0 / NB)


# --------------------------------------------------------------------------
# JAX glue: lane padding, parameter packing, im2col, pallas_call.
# --------------------------------------------------------------------------
def _pad_mat(w):
    return jnp.pad(w, ((0, LANE - w.shape[0]), (0, LANE - w.shape[1])))


def _pad_vec(v):
    return jnp.pad(v, ((0, 0), (0, LANE - v.shape[1])))


def pack_params(p):
    """Pack all parameters into one lane-padded (SLAB_ROWS, 128) f32 slab."""
    mats = [_pad_mat(p[n]) for n in MAT_NAMES]
    vecs = [_pad_vec(p[n]) for n in VEC_NAMES]
    vecs.append(jnp.zeros((VEC_ROWS - len(VEC_NAMES), LANE), jnp.float32))
    return jnp.concatenate(mats + vecs, axis=0).astype(jnp.float32)


def im2col_pad(x_nchw):
    """NCHW -> lane-padded im2col patches (B*H*W, 128)."""
    x = jnp.transpose(x_nchw, (0, 2, 3, 1))                        # NHWC
    xp = jnp.pad(x, ((0, 0), (1, 1), (1, 1), (0, 0)))
    cols = [xp[:, kh:kh + H, kw:kw + W, :] for kh in range(K) for kw in range(K)]
    patches = jnp.stack(cols, axis=3)                              # (B,H,W,K*K,C)
    flat = patches.reshape(BATCH * H * W, K * K * C_IN)
    return jnp.pad(flat, ((0, 0), (0, LANE - K * K * C_IN)))


def simsiam_loss(x1, x2, slab):
    # rows: [v1b0 | v1b1 | v2b0 | v2b1], each CHUNK=256 rows -> one grid step
    xcol = jnp.concatenate([im2col_pad(x1), im2col_pad(x2)], axis=0)   # (1024,128)
    loss = pl.pallas_call(
        simsiam_kernel,
        out_shape=jax.ShapeDtypeStruct((1, 1), jnp.float32),
        grid=(N_CHUNKS,),
        in_specs=[pl.BlockSpec((CHUNK, LANE), lambda i: (i, 0)),        # pipelined
                  pl.BlockSpec(memory_space=pltpu.MemorySpace.VMEM)],   # slab: 1 DMA
        out_specs=pl.BlockSpec(memory_space=pltpu.MemorySpace.SMEM),    # scalar loss
        scratch_shapes=[pltpu.VMEM((NB, LANE), jnp.float32)],           # pooled feats
        compiler_params=pltpu.CompilerParams(
            dimension_semantics=("arbitrary",)),
    )(xcol, slab)
    return loss[0, 0]


def init_params(key):
    ks = jax.random.split(key, 6)

    def wmat(k, shape):
        return jax.random.normal(k, shape, jnp.float32) * 0.1

    def bias(dim):
        return jnp.full((1, dim), 0.01, jnp.float32)

    return {
        "conv_w_col": wmat(ks[0], (K * K * C_IN, FEAT_DIM)),
        "conv_b": jnp.zeros((1, FEAT_DIM), jnp.float32),
        # projector (encoder.fc): Linear/BN/ReLU x2 + Linear/BN
        "pw1": wmat(ks[1], (FEAT_DIM, PROJ_HIDDEN)), "pb1": bias(PROJ_HIDDEN),
        "pg1": jnp.ones((1, PROJ_HIDDEN), jnp.float32), "pt1": jnp.zeros((1, PROJ_HIDDEN), jnp.float32),
        "pw2": wmat(ks[2], (PROJ_HIDDEN, PROJ_HIDDEN)), "pb2": bias(PROJ_HIDDEN),
        "pg2": jnp.ones((1, PROJ_HIDDEN), jnp.float32), "pt2": jnp.zeros((1, PROJ_HIDDEN), jnp.float32),
        "pw3": wmat(ks[3], (PROJ_HIDDEN, OUT_DIM)), "pb3": bias(OUT_DIM),
        "pg3": jnp.ones((1, OUT_DIM), jnp.float32), "pt3": jnp.zeros((1, OUT_DIM), jnp.float32),
        # predictor: Linear/BN/ReLU + Linear
        "qw1": wmat(ks[4], (OUT_DIM, PRED_HIDDEN)), "qb1": bias(PRED_HIDDEN),
        "qg1": jnp.ones((1, PRED_HIDDEN), jnp.float32), "qt1": jnp.zeros((1, PRED_HIDDEN), jnp.float32),
        "qw2": wmat(ks[5], (PRED_HIDDEN, OUT_DIM)), "qb2": bias(OUT_DIM),
    }


# --------------------------------------------------------------------------
# Pure-JAX reference (mirrors the PyTorch forward semantics)
# --------------------------------------------------------------------------
def reference_loss(x1, x2, p):
    def backbone(x):
        xh = jnp.transpose(x, (0, 2, 3, 1))
        wc = p["conv_w_col"].reshape(K, K, C_IN, FEAT_DIM)
        y = jax.lax.conv_general_dilated(
            xh, wc, window_strides=(1, 1), padding="SAME",
            dimension_numbers=("NHWC", "HWIO", "NHWC"))
        y = jnp.maximum(y + p["conv_b"][0], 0.0)
        return jnp.mean(y, axis=(1, 2))

    def linear(x, w, b):
        return x @ w + b

    def bn(x, g, t):
        mu = x.mean(0, keepdims=True)
        var = ((x - mu) ** 2).mean(0, keepdims=True)
        return (x - mu) / jnp.sqrt(var + BN_EPS) * g + t

    def projector(x):
        h = jax.nn.relu(bn(linear(x, p["pw1"], p["pb1"]), p["pg1"], p["pt1"]))
        h = jax.nn.relu(bn(linear(h, p["pw2"], p["pb2"]), p["pg2"], p["pt2"]))
        return bn(linear(h, p["pw3"], p["pb3"]), p["pg3"], p["pt3"])

    def predictor(x):
        h = jax.nn.relu(bn(linear(x, p["qw1"], p["qb1"]), p["qg1"], p["qt1"]))
        return linear(h, p["qw2"], p["qb2"])

    def D(a, b):
        b = jax.lax.stop_gradient(b)
        num = jnp.sum(a * b, axis=-1)
        den = jnp.maximum(jnp.linalg.norm(a, axis=-1) * jnp.linalg.norm(b, axis=-1),
                          COS_EPS)
        return -jnp.mean(num / den)

    f1, f2 = backbone(x1), backbone(x2)
    z1, z2 = projector(f1), projector(f2)
    p1, p2 = predictor(z1), predictor(z2)
    return 0.5 * D(p1, z2) + 0.5 * D(p2, z1)


if __name__ == "__main__":
    key = jax.random.PRNGKey(0)
    k1, k2, kp = jax.random.split(key, 3)
    x1 = jax.random.normal(k1, (BATCH, C_IN, H, W), jnp.float32)
    x2 = jax.random.normal(k2, (BATCH, C_IN, H, W), jnp.float32)
    params = init_params(kp)
    slab = pack_params(params)          # packed once, outside jit

    loss = jax.jit(simsiam_loss)(x1, x2, slab)
    loss = jax.block_until_ready(loss)

    ref = reference_loss(x1, x2, params)
    assert jnp.allclose(loss, ref, rtol=1e-2, atol=1e-2), (float(loss), float(ref))
    print("KERNEL_OK")
</pallas_src>

<mosaic_0001>
module attributes {stable_mosaic.version = 11 : i64} {
  func.func @simsiam_kernel(%arg0: i32, %arg1: memref<256x128xf32, #tpu.memory_space<vmem>>, %arg2: memref<784x128xf32, #tpu.memory_space<vmem>>, %arg3: memref<1x1xf32, #tpu.memory_space<smem>>, %arg4: memref<4x128xf32, #tpu.memory_space<vmem>>) attributes {dimension_semantics = [#tpu.dimension_semantics<arbitrary>], iteration_bounds = array<i64: 4>, scalar_prefetch = 0 : i64, scratch_operands = 1 : i64, tpu.core_type = #tpu.core_type<tc>, window_params = [{transform_indices = @transform_0, window_bounds = array<i64: 256, 128>}, {pipeline_mode = #tpu.pipeline_mode<synchronous>, transform_indices = @transform_1, window_bounds = array<i64: 784, 128>}, {transform_indices = @transform_2, window_bounds = array<i64: 1, 1>}]} {
    %c0_i32 = arith.constant 0 : i32
    %0 = arith.cmpi eq, %arg0, %c0_i32 : i32
    %1 = arith.extui %0 : i1 to i32
    %c0_i32_0 = arith.constant 0 : i32
    %2 = arith.cmpi ne, %1, %c0_i32_0 : i32
    scf.if %2 {
      %cst_14 = arith.constant 0.000000e+00 : f32
      %30 = vector.broadcast %cst_14 : f32 to vector<4x128xf32>
      %c0_15 = arith.constant 0 : index
      %c0_16 = arith.constant 0 : index
      %31 = vector.load %arg4[%c0_15, %c0_16] : memref<4x128xf32, #tpu.memory_space<vmem>>, vector<4x128xf32>
      tpu.vector_store %arg4[%c0_15, %c0_16], %30 {strides = array<i32>} : memref<4x128xf32, #tpu.memory_space<vmem>>, vector<4x128xf32>,
    } else {
    }
    %c0 = arith.constant 0 : index
    %c0_1 = arith.constant 0 : index
    %3 = vector.load %arg2[%c0, %c0_1] : memref<784x128xf32, #tpu.memory_space<vmem>>, vector<128x128xf32>
    %c768 = arith.constant 768 : index
    %c0_2 = arith.constant 0 : index
    %4 = vector.load %arg2[%c768, %c0_2] : memref<784x128xf32, #tpu.memory_space<vmem>>, vector<1x128xf32>
    %c0_3 = arith.constant 0 : index
    %c0_4 = arith.constant 0 : index
    %5 = vector.load %arg1[%c0_3, %c0_4] : memref<256x128xf32, #tpu.memory_space<vmem>>, vector<256x128xf32>
    %cst = arith.constant dense<0.000000e+00> : vector<256x128xf32>
    %6 = tpu.matmul %5, %3, %cst {dimension_numbers = #tpu.dot_dimension_numbers<[1], [0], [0], [1], [0, 0, 1, 1], [], []>} : vector<256x128xf32>, vector<128x128xf32>, vector<256x128xf32> -> vector<256x128xf32>
    %7 = vector.broadcast %4 : vector<1x128xf32> to vector<256x128xf32>
    %8 = arith.addf %6, %7 : vector<256x128xf32>
    %cst_5 = arith.constant 0.000000e+00 : f32
    %9 = vector.broadcast %cst_5 : f32 to vector<256x128xf32>
    %10 = arith.maximumf %8, %9 : vector<256x128xf32>
    %cst_6 = arith.constant dense<0.000000e+00> : vector<128xf32>
    %11 = vector.multi_reduction <add>, %10, %cst_6 [0] : vector<256x128xf32> to vector<128xf32>
    %12 = vector.shape_cast %11 : vector<128xf32> to vector<1x128xf32>
    %cst_7 = arith.constant 3.906250e-03 : f32
    %13 = vector.broadcast %cst_7 : f32 to vector<1x128xf32>
    %14 = arith.mulf %12, %13 : vector<1x128xf32>
    %15 = tpu.iota {dimensions = array<i32: 0>} : vector<4x1xi32>
    %c0_8 = arith.constant 0 : index
    %c0_9 = arith.constant 0 : index
    %16 = vector.load %arg4[%c0_8, %c0_9] : memref<4x128xf32, #tpu.memory_space<vmem>>, vector<4x128xf32>
    %17 = vector.broadcast %arg0 : i32 to vector<4x1xi32>
    %18 = arith.cmpi eq, %15, %17 : vector<4x1xi32>
    %cst_10 = arith.constant 0.000000e+00 : f32
    %19 = vector.shape_cast %18 : vector<4x1xi1> to vector<4x1xi1>
    %20 = vector.broadcast %19 : vector<4x1xi1> to vector<4x128xi1>
    %21 = vector.shape_cast %14 : vector<1x128xf32> to vector<1x128xf32>
    %22 = vector.broadcast %21 : vector<1x128xf32> to vector<4x128xf32>
    %23 = vector.broadcast %cst_10 : f32 to vector<4x128xf32>
    %24 = arith.select %20, %22, %23 : vector<4x128xi1>, vector<4x128xf32>
    %25 = arith.addf %16, %24 : vector<4x128xf32>
    %c0_11 = arith.constant 0 : index
    %c0_12 = arith.constant 0 : index
    %26 = vector.load %arg4[%c0_11, %c0_12] : memref<4x128xf32, #tpu.memory_space<vmem>>, vector<4x128xf32>
    tpu.vector_store %arg4[%c0_11, %c0_12], %25 {strides = array<i32>} : memref<4x128xf32, #tpu.memory_space<vmem>>, vector<4x128xf32>,
    %c3_i32 = arith.constant 3 : i32
    %27 = arith.cmpi eq, %arg0, %c3_i32 : i32
    %28 = arith.extui %27 : i1 to i32
    %c0_i32_13 = arith.constant 0 : i32
    %29 = arith.cmpi ne, %28, %c0_i32_13 : i32
    scf.if %29 {
      %c768_14 = arith.constant 768 : index
      %c0_15 = arith.constant 0 : index
      %30 = vector.load %arg2[%c768_14, %c0_15] : memref<784x128xf32, #tpu.memory_space<vmem>>, vector<16x128xf32>
      %c128 = arith.constant 128 : index
      %c0_16 = arith.constant 0 : index
      %31 = vector.load %arg2[%c128, %c0_16] : memref<784x128xf32, #tpu.memory_space<vmem>>, vector<128x128xf32>
      %c256 = arith.constant 256 : index
      %c0_17 = arith.constant 0 : index
      %32 = vector.load %arg2[%c256, %c0_17] : memref<784x128xf32, #tpu.memory_space<vmem>>, vector<128x128xf32>
      %c384 = arith.constant 384 : index
      %c0_18 = arith.constant 0 : index
      %33 = vector.load %arg2[%c384, %c0_18] : memref<784x128xf32, #tpu.memory_space<vmem>>, vector<128x128xf32>
      %c512 = arith.constant 512 : index
      %c0_19 = arith.constant 0 : index
      %34 = vector.load %arg2[%c512, %c0_19] : memref<784x128xf32, #tpu.memory_space<vmem>>, vector<128x128xf32>
      %c640 = arith.constant 640 : index
      %c0_20 = arith.constant 0 : index
      %35 = vector.load %arg2[%c640, %c0_20] : memref<784x128xf32, #tpu.memory_space<vmem>>, vector<128x128xf32>
      %36 = vector.extract_strided_slice %30 {offsets = [1, 0], sizes = [1, 128], strides = [1, 1]} : vector<16x128xf32> to vector<1x128xf32>
      %37 = vector.extract_strided_slice %30 {offsets = [2, 0], sizes = [1, 128], strides = [1, 1]} : vector<16x128xf32> to vector<1x128xf32>
      %38 = vector.extract_strided_slice %30 {offsets = [3, 0], sizes = [1, 128], strides = [1, 1]} : vector<16x128xf32> to vector<1x128xf32>
      %39 = vector.extract_strided_slice %30 {offsets = [4, 0], sizes = [1, 128], strides = [1, 1]} : vector<16x128xf32> to vector<1x128xf32>
      %40 = vector.extract_strided_slice %30 {offsets = [5, 0], sizes = [1, 128], strides = [1, 1]} : vector<16x128xf32> to vector<1x128xf32>
      %41 = vector.extract_strided_slice %30 {offsets = [6, 0], sizes = [1, 128], strides = [1, 1]} : vector<16x128xf32> to vector<1x128xf32>
      %42 = vector.extract_strided_slice %30 {offsets = [7, 0], sizes = [1, 128], strides = [1, 1]} : vector<16x128xf32> to vector<1x128xf32>
      %43 = vector.extract_strided_slice %30 {offsets = [8, 0], sizes = [1, 128], strides = [1, 1]} : vector<16x128xf32> to vector<1x128xf32>
      %44 = vector.extract_strided_slice %30 {offsets = [9, 0], sizes = [1, 128], strides = [1, 1]} : vector<16x128xf32> to vector<1x128xf32>
      %45 = vector.extract_strided_slice %30 {offsets = [10, 0], sizes = [1, 128], strides = [1, 1]} : vector<16x128xf32> to vector<1x128xf32>
      %46 = vector.extract_strided_slice %30 {offsets = [11, 0], sizes = [1, 128], strides = [1, 1]} : vector<16x128xf32> to vector<1x128xf32>
      %47 = vector.extract_strided_slice %30 {offsets = [12, 0], sizes = [1, 128], strides = [1, 1]} : vector<16x128xf32> to vector<1x128xf32>
      %48 = vector.extract_strided_slice %30 {offsets = [13, 0], sizes = [1, 128], strides = [1, 1]} : vector<16x128xf32> to vector<1x128xf32>
      %c0_21 = arith.constant 0 : index
      %c0_22 = arith.constant 0 : index
      %49 = vector.load %arg4[%c0_21, %c0_22] : memref<4x128xf32, #tpu.memory_space<vmem>>, vector<4x128xf32>
      %c2_i32 = arith.constant 2 : i32
      %c0_i32_23 = arith.constant 0 : i32
      %50 = arith.cmpi eq, %c2_i32, %c0_i32_23 : i32
      %c1_i32 = arith.constant 1 : i32
      %51 = arith.select %50, %c1_i32, %c2_i32 : i32
      %52 = vector.broadcast %51 : i32 to vector<4x1xi32>
      %53 = arith.remsi %15, %52 : vector<4x1xi32>
      %c0_i32_24 = arith.constant 0 : i32
      %54 = vector.broadcast %c0_i32_24 : i32 to vector<4x1xi32>
      %55 = arith.cmpi ne, %53, %54 : vector<4x1xi32>
      %c0_i32_25 = arith.constant 0 : i32
      %56 = vector.broadcast %c0_i32_25 : i32 to vector<4x1xi32>
      %57 = arith.cmpi slt, %53, %56 : vector<4x1xi32>
      %c0_i32_26 = arith.constant 0 : i32
      %58 = arith.cmpi slt, %51, %c0_i32_26 : i32
      %59 = vector.broadcast %58 : i1 to vector<4x1xi1>
      %60 = vector.broadcast %59 : vector<4x1xi1> to vector<4x1xi1>
      %61 = arith.xori %57, %60 : vector<4x1xi1>
      %62 = arith.andi %61, %55 : vector<4x1xi1>
      %63 = vector.broadcast %51 : i32 to vector<4x1xi32>
      %64 = arith.addi %53, %63 : vector<4x1xi32>
      %65 = arith.select %62, %64, %53 : vector<4x1xi1>, vector<4x1xi32>
      %c0_i32_27 = arith.constant 0 : i32
      %66 = vector.broadcast %c0_i32_27 : i32 to vector<4x1xi32>
      %67 = arith.cmpi eq, %65, %66 : vector<4x1xi32>
      %cst_28 = arith.constant dense<0.000000e+00> : vector<4x128xf32>
      %68 = tpu.matmul %49, %31, %cst_28 {dimension_numbers = #tpu.dot_dimension_numbers<[1], [0], [0], [1], [0, 0, 1, 1], [], []>} : vector<4x128xf32>, vector<128x128xf32>, vector<4x128xf32> -> vector<4x128xf32>
      %69 = vector.broadcast %36 : vector<1x128xf32> to vector<4x128xf32>
      %70 = arith.addf %68, %69 : vector<4x128xf32>
      %71 = vector.extract_strided_slice %70 {offsets = [1, 0], sizes = [3, 128], strides = [1, 1]} : vector<4x128xf32> to vector<3x128xf32>
      %72 = vector.extract_strided_slice %70 {offsets = [0, 0], sizes = [1, 128], strides = [1, 1]} : vector<4x128xf32> to vector<1x128xf32>
      %73 = tpu.concatenate %71, %72 in 0 : vector<3x128xf32>, vector<1x128xf32> -> vector<4x128xf32>
      %74 = vector.extract_strided_slice %70 {offsets = [3, 0], sizes = [1, 128], strides = [1, 1]} : vector<4x128xf32> to vector<1x128xf32>
      %75 = vector.extract_strided_slice %70 {offsets = [0, 0], sizes = [3, 128], strides = [1, 1]} : vector<4x128xf32> to vector<3x128xf32>
      %76 = tpu.concatenate %74, %75 in 0 : vector<1x128xf32>, vector<3x128xf32> -> vector<4x128xf32>
      %77 = vector.shape_cast %67 : vector<4x1xi1> to vector<4x1xi1>
      %78 = vector.broadcast %77 : vector<4x1xi1> to vector<4x128xi1>
      %79 = arith.select %78, %73, %76 : vector<4x128xi1>, vector<4x128xf32>
      %80 = arith.addf %70, %79 : vector<4x128xf32>
      %cst_29 = arith.constant 5.000000e-01 : f32
      %81 = vector.broadcast %cst_29 : f32 to vector<4x128xf32>
      %82 = arith.mulf %81, %80 : vector<4x128xf32>
      %83 = arith.subf %70, %82 : vector<4x128xf32>
      %84 = arith.mulf %83, %83 : vector<4x128xf32>
      %cst_30 = arith.constant 9.99999974E-6 : f32
      %85 = vector.broadcast %cst_30 : f32 to vector<4x128xf32>
      %86 = arith.addf %84, %85 : vector<4x128xf32>
      %87 = math.rsqrt %86 : vector<4x128xf32>
      %88 = arith.mulf %83, %87 : vector<4x128xf32>
      %89 = vector.broadcast %37 : vector<1x128xf32> to vector<4x128xf32>
      %90 = arith.mulf %88, %89 : vector<4x128xf32>
      %91 = vector.broadcast %38 : vector<1x128xf32> to vector<4x128xf32>
      %92 = arith.addf %90, %91 : vector<4x128xf32>
      %cst_31 = arith.constant 0.000000e+00 : f32
      %93 = vector.broadcast %cst_31 : f32 to vector<4x128xf32>
      %94 = arith.maximumf %92, %93 : vector<4x128xf32>
      %cst_32 = arith.constant dense<0.000000e+00> : vector<4x128xf32>
      %95 = tpu.matmul %94, %32, %cst_32 {dimension_numbers = #tpu.dot_dimension_numbers<[1], [0], [0], [1], [0, 0, 1, 1], [], []>} : vector<4x128xf32>, vector<128x128xf32>, vector<4x128xf32> -> vector<4x128xf32>
      %96 = vector.broadcast %39 : vector<1x128xf32> to vector<4x128xf32>
      %97 = arith.addf %95, %96 : vector<4x128xf32>
      %98 = vector.extract_strided_slice %97 {offsets = [1, 0], sizes = [3, 128], strides = [1, 1]} : vector<4x128xf32> to vector<3x128xf32>
      %99 = vector.extract_strided_slice %97 {offsets = [0, 0], sizes = [1, 128], strides = [1, 1]} : vector<4x128xf32> to vector<1x128xf32>
      %100 = tpu.concatenate %98, %99 in 0 : vector<3x128xf32>, vector<1x128xf32> -> vector<4x128xf32>
      %101 = vector.extract_strided_slice %97 {offsets = [3, 0], sizes = [1, 128], strides = [1, 1]} : vector<4x128xf32> to vector<1x128xf32>
      %102 = vector.extract_strided_slice %97 {offsets = [0, 0], sizes = [3, 128], strides = [1, 1]} : vector<4x128xf32> to vector<3x128xf32>
      %103 = tpu.concatenate %101, %102 in 0 : vector<1x128xf32>, vector<3x128xf32> -> vector<4x128xf32>
      %104 = vector.shape_cast %67 : vector<4x1xi1> to vector<4x1xi1>
      %105 = vector.broadcast %104 : vector<4x1xi1> to vector<4x128xi1>
      %106 = arith.select %105, %100, %103 : vector<4x128xi1>, vector<4x128xf32>
      %107 = arith.addf %97, %106 : vector<4x128xf32>
      %cst_33 = arith.constant 5.000000e-01 : f32
      %108 = vector.broadcast %cst_33 : f32 to vector<4x128xf32>
      %109 = arith.mulf %108, %107 : vector<4x128xf32>
      %110 = arith.subf %97, %109 : vector<4x128xf32>
      %111 = arith.mulf %110, %110 : vector<4x128xf32>
      %cst_34 = arith.constant 9.99999974E-6 : f32
      %112 = vector.broadcast %cst_34 : f32 to vector<4x128xf32>
      %113 = arith.addf %111, %112 : vector<4x128xf32>
      %114 = math.rsqrt %113 : vector<4x128xf32>
      %115 = arith.mulf %110, %114 : vector<4x128xf32>
      %116 = vector.broadcast %40 : vector<1x128xf32> to vector<4x128xf32>
      %117 = arith.mulf %115, %116 : vector<4x128xf32>
      %118 = vector.broadcast %41 : vector<1x128xf32> to vector<4x128xf32>
      %119 = arith.addf %117, %118 : vector<4x128xf32>
      %cst_35 = arith.constant 0.000000e+00 : f32
      %120 = vector.broadcast %cst_35 : f32 to vector<4x128xf32>
      %121 = arith.maximumf %119, %120 : vector<4x128xf32>
      %cst_36 = arith.constant dense<0.000000e+00> : vector<4x128xf32>
      %122 = tpu.matmul %121, %33, %cst_36 {dimension_numbers = #tpu.dot_dimension_numbers<[1], [0], [0], [1], [0, 0, 1, 1], [], []>} : vector<4x128xf32>, vector<128x128xf32>, vector<4x128xf32> -> vector<4x128xf32>
      %123 = vector.broadcast %42 : vector<1x128xf32> to vector<4x128xf32>
      %124 = arith.addf %122, %123 : vector<4x128xf32>
      %125 = vector.extract_strided_slice %124 {offsets = [1, 0], sizes = [3, 128], strides = [1, 1]} : vector<4x128xf32> to vector<3x128xf32>
      %126 = vector.extract_strided_slice %124 {offsets = [0, 0], sizes = [1, 128], strides = [1, 1]} : vector<4x128xf32> to vector<1x128xf32>
      %127 = tpu.concatenate %125, %126 in 0 : vector<3x128xf32>, vector<1x128xf32> -> vector<4x128xf32>
      %128 = vector.extract_strided_slice %124 {offsets = [3, 0], sizes = [1, 128], strides = [1, 1]} : vector<4x128xf32> to vector<1x128xf32>
      %129 = vector.extract_strided_slice %124 {offsets = [0, 0], sizes = [3, 128], strides = [1, 1]} : vector<4x128xf32> to vector<3x128xf32>
      %130 = tpu.concatenate %128, %129 in 0 : vector<1x128xf32>, vector<3x128xf32> -> vector<4x128xf32>
      %131 = vector.shape_cast %67 : vector<4x1xi1> to vector<4x1xi1>
      %132 = vector.broadcast %131 : vector<4x1xi1> to vector<4x128xi1>
      %133 = arith.select %132, %127, %130 : vector<4x128xi1>, vector<4x128xf32>
      %134 = arith.addf %124, %133 : vector<4x128xf32>
      %cst_37 = arith.constant 5.000000e-01 : f32
      %135 = vector.broadcast %cst_37 : f32 to vector<4x128xf32>
      %136 = arith.mulf %135, %134 : vector<4x128xf32>
      %137 = arith.subf %124, %136 : vector<4x128xf32>
      %138 = arith.mulf %137, %137 : vector<4x128xf32>
      %cst_38 = arith.constant 9.99999974E-6 : f32
      %139 = vector.broadcast %cst_38 : f32 to vector<4x128xf32>
      %140 = arith.addf %138, %139 : vector<4x128xf32>
      %141 = math.rsqrt %140 : vector<4x128xf32>
      %142 = arith.mulf %137, %141 : vector<4x128xf32>
      %143 = vector.broadcast %43 : vector<1x128xf32> to vector<4x128xf32>
      %144 = arith.mulf %142, %143 : vector<4x128xf32>
      %145 = vector.broadcast %44 : vector<1x128xf32> to vector<4x128xf32>
      %146 = arith.addf %144, %145 : vector<4x128xf32>
      %cst_39 = arith.constant dense<0.000000e+00> : vector<4x128xf32>
      %147 = tpu.matmul %146, %34, %cst_39 {dimension_numbers = #tpu.dot_dimension_numbers<[1], [0], [0], [1], [0, 0, 1, 1], [], []>} : vector<4x128xf32>, vector<128x128xf32>, vector<4x128xf32> -> vector<4x128xf32>
      %148 = vector.broadcast %45 : vector<1x128xf32> to vector<4x128xf32>
      %149 = arith.addf %147, %148 : vector<4x128xf32>
      %150 = vector.extract_strided_slice %149 {offsets = [1, 0], sizes = [3, 128], strides = [1, 1]} : vector<4x128xf32> to vector<3x128xf32>
      %151 = vector.extract_strided_slice %149 {offsets = [0, 0], sizes = [1, 128], strides = [1, 1]} : vector<4x128xf32> to vector<1x128xf32>
      %152 = tpu.concatenate %150, %151 in 0 : vector<3x128xf32>, vector<1x128xf32> -> vector<4x128xf32>
      %153 = vector.extract_strided_slice %149 {offsets = [3, 0], sizes = [1, 128], strides = [1, 1]} : vector<4x128xf32> to vector<1x128xf32>
      %154 = vector.extract_strided_slice %149 {offsets = [0, 0], sizes = [3, 128], strides = [1, 1]} : vector<4x128xf32> to vector<3x128xf32>
      %155 = tpu.concatenate %153, %154 in 0 : vector<1x128xf32>, vector<3x128xf32> -> vector<4x128xf32>
      %156 = vector.shape_cast %67 : vector<4x1xi1> to vector<4x1xi1>
      %157 = vector.broadcast %156 : vector<4x1xi1> to vector<4x128xi1>
      %158 = arith.select %157, %152, %155 : vector<4x128xi1>, vector<4x128xf32>
      %159 = arith.addf %149, %158 : vector<4x128xf32>
      %cst_40 = arith.constant 5.000000e-01 : f32
      %160 = vector.broadcast %cst_40 : f32 to vector<4x128xf32>
      %161 = arith.mulf %160, %159 : vector<4x128xf32>
      %162 = arith.subf %149, %161 : vector<4x128xf32>
      %163 = arith.mulf %162, %162 : vector<4x128xf32>
      %cst_41 = arith.constant 9.99999974E-6 : f32
      %164 = vector.broadcast %cst_41 : f32 to vector<4x128xf32>
      %165 = arith.addf %163, %164 : vector<4x128xf32>
      %166 = math.rsqrt %165 : vector<4x128xf32>
      %167 = arith.mulf %162, %166 : vector<4x128xf32>
      %168 = vector.broadcast %46 : vector<1x128xf32> to vector<4x128xf32>
      %169 = arith.mulf %167, %168 : vector<4x128xf32>
      %170 = vector.broadcast %47 : vector<1x128xf32> to vector<4x128xf32>
      %171 = arith.addf %169, %170 : vector<4x128xf32>
      %cst_42 = arith.constant 0.000000e+00 : f32
      %172 = vector.broadcast %cst_42 : f32 to vector<4x128xf32>
      %173 = arith.maximumf %171, %172 : vector<4x128xf32>
      %cst_43 = arith.constant dense<0.000000e+00> : vector<4x128xf32>
      %174 = tpu.matmul %173, %35, %cst_43 {dimension_numbers = #tpu.dot_dimension_numbers<[1], [0], [0], [1], [0, 0, 1, 1], [], []>} : vector<4x128xf32>, vector<128x128xf32>, vector<4x128xf32> -> vector<4x128xf32>
      %175 = vector.broadcast %48 : vector<1x128xf32> to vector<4x128xf32>
      %176 = arith.addf %174, %175 : vector<4x128xf32>
      %177 = vector.extract_strided_slice %146 {offsets = [2, 0], sizes = [2, 128], strides = [1, 1]} : vector<4x128xf32> to vector<2x128xf32>
      %178 = vector.extract_strided_slice %146 {offsets = [0, 0], sizes = [2, 128], strides = [1, 1]} : vector<4x128xf32> to vector<2x128xf32>
      %179 = tpu.concatenate %177, %178 in 0 : vector<2x128xf32>, vector<2x128xf32> -> vector<4x128xf32>
      %180 = arith.mulf %176, %179 : vector<4x128xf32>
      %cst_44 = arith.constant dense<0.000000e+00> : vector<4xf32>
      %181 = vector.multi_reduction <add>, %180, %cst_44 [1] : vector<4x128xf32> to vector<4xf32>
      %182 = vector.shape_cast %181 : vector<4xf32> to vector<4x1xf32>
      %183 = arith.mulf %176, %176 : vector<4x128xf32>
      %cst_45 = arith.constant dense<0.000000e+00> : vector<4xf32>
      %184 = vector.multi_reduction <add>, %183, %cst_45 [1] : vector<4x128xf32> to vector<4xf32>
      %185 = vector.shape_cast %184 : vector<4xf32> to vector<4x1xf32>
      %186 = arith.mulf %179, %179 : vector<4x128xf32>
      %cst_46 = arith.constant dense<0.000000e+00> : vector<4xf32>
      %187 = vector.multi_reduction <add>, %186, %cst_46 [1] : vector<4x128xf32> to vector<4xf32>
      %188 = vector.shape_cast %187 : vector<4xf32> to vector<4x1xf32>
      %189 = arith.mulf %185, %188 : vector<4x1xf32>
      %190 = math.rsqrt %189 : vector<4x1xf32>
      %cst_47 = arith.constant 1.000000e+08 : f32
      %191 = vector.broadcast %cst_47 : f32 to vector<4x1xf32>
      %192 = arith.minimumf %190, %191 : vector<4x1xf32>
      %193 = arith.mulf %182, %192 : vector<4x1xf32>
      %194 = vector.shape_cast %193 : vector<4x1xf32> to vector<1x4x1xf32>
      %cst_48 = arith.constant dense<0.000000e+00> : vector<1xf32>
      %195 = vector.multi_reduction <add>, %194, %cst_48 [1, 2] : vector<1x4x1xf32> to vector<1xf32>
      %196 = vector.shape_cast %195 : vector<1xf32> to vector<1x1x1xf32>
      %197 = vector.extract %196[0, 0, 0] : f32 from vector<1x1x1xf32>
      %cst_49 = arith.constant 0.000000e+00 : f32
      %198 = arith.subf %cst_49, %197 : f32
      %cst_50 = arith.constant 2.500000e-01 : f32
      %199 = arith.mulf %198, %cst_50 : f32
      %c0_51 = arith.constant 0 : index
      %c0_52 = arith.constant 0 : index
      %200 = memref.load %arg3[%c0_51, %c0_52] : memref<1x1xf32, #tpu.memory_space<smem>>
      memref.store %199, %arg3[%c0_51, %c0_52] : memref<1x1xf32, #tpu.memory_space<smem>>
    } else {
    }
    return
  }
  func.func @transform_0(%arg0: i32) -> (i32, i32) {
    %c0_i32 = arith.constant 0 : i32
    %c0_i32_0 = arith.constant 0 : i32
    return %arg0, %c0_i32 : i32, i32
  }
  func.func @transform_1(%arg0: i32) -> (i32, i32) {
    %c0_i32 = arith.constant 0 : i32
    %c0_i32_0 = arith.constant 0 : i32
    %c0_i32_1 = arith.constant 0 : i32
    return %c0_i32, %c0_i32_0 : i32, i32
  }
  func.func @transform_2(%arg0: i32) -> (i32, i32) {
    %c0_i32 = arith.constant 0 : i32
    %c0_i32_0 = arith.constant 0 : i32
    %c0_i32_1 = arith.constant 0 : i32
    return %c0_i32, %c0_i32_0 : i32, i32
  }
}

</mosaic_0001>

<llo_original>
// kernel: simsiam_loss.1
$region0: #{simsiam_loss.1}
  #allocation0 [shape = 'u32[]', space=smem, size = 0x4, offset = 0x4, fixed_abs, tag = 'smem constant byte address 0x4 - core index']
  #allocation1 [shape = 'u32[144,128]{1,0:T(1,128)}', space=vmem, size = 0x12000, scoped, tag = 'internal scratch']
  #allocation2 [shape = 'f32[4,128]{1,0:T(4,128)}', space=vmem, size = 0x800, scoped, tag = 'scratch operand']
  %s0 = inlined_call_operand.vmem [shape: f32[1024,128], index: 0, kind: input, shape index: {}]
  %s1 = inlined_call_operand.vmem [shape: f32[784,128], index: 1, kind: input, shape index: {}]
  %s2 = inlined_call_operand.hbm [shape: f32[1,1], index: 2, kind: output, shape index: {}]
  %s3 = sld [smem:[#allocation0]]
  $region49: #{simsiam_loss.1} parent=0
    _
  %s5 = ssub.s32 1, %s3
  %s6 = scalar_select 0, %s5, %s3
  $region1: #{simsiam_loss.1} parent=0
    #allocation3 [shape = 'u8[512]{0}', space=smem, size = 0x200, scoped, tag = 'output window, operand 0, single buffered']
    #allocation4 [shape = 's32[2]{0}', space=sflag, size = 0x8, scoped, tag = 'scoped memory for simsiam_loss.1']
    %7 = vsyncpa [#allocation4], 0
    loop: start=0, step=1, limit=6
    $region2: #{simsiam_loss.1} parent=1 // loop_pre_header
      _
    $region3: #{simsiam_loss.1} parent=1 // loop_header
      %s9 = sphi 0, %s13
      %p10 = scmp.ge.s32.totalorder %s9, 6
      %s19 = sphi 0, %s21
      %s22 = sphi 0, %s19
      %s23 = sphi 0, %s22
      %s39 = sphi 0, %s23
      %s43 = sphi 0, %s43
      %s45 = sphi 0, %s43
      %s46 = sphi 0, %s45
      %s60 = sphi 0, %s46
      %s64 = sphi 0, %s64
      %s66 = sphi 0, %s64
      %s67 = sphi 0, %s66
      %s81 = sphi 0, %s67
    $region4: #{simsiam_loss.1} parent=1 // loop_header_branch
      %12 = sbr.rel (%p10) target = $region8
    $region5: #{simsiam_loss.1} parent=1 // loop_body
      %s14 = ssub.s32 %s9, 1
      %s15 = ssub.s32 %s9, 2
      %s16 = sadd.s32 %s9, 1
      %s17 = ssub.s32 %s9, %s16
      %p18 = scmp.eq.s32.totalorder %s17, 0
      %s20 = sadd.s32 %s19, 1
      %s21 = scalar_select %p18, %s19, %s20
      %p24 = pneg %p18
      %p25 = scmp.eq.s32.totalorder %s9, 3
      %p26 = por %p24, %p25
      %p27 = scmp.ne.s32.totalorder %s19, %s22
      %p28 = scmp.eq.s32.totalorder %s9, 0
      %p29 = por %p27, %p28
      %p30 = scmp.ne.s32.totalorder %s19, %s22
      %p31 = scmp.eq.s32.totalorder %s14, 3
      %p32 = por %p30, %p31
      %p33 = scmp.ne.s32.totalorder %s22, %s23
      %p34 = scmp.eq.s32.totalorder %s14, 0
      %p35 = por %p33, %p34
      %p36 = scmp.ne.s32.totalorder %s22, %s23
      %p37 = scmp.eq.s32.totalorder %s15, 3
      %p38 = por %p36, %p37
      %p40 = scmp.ne.s32.totalorder %s23, %s39
      %p41 = scmp.eq.s32.totalorder %s15, 0
      %p42 = por %p40, %p41
      %s44 = sadd.s32 %s43, 1
      %p47 = scmp.eq.s32.totalorder %s9, 3
      %p48 = scmp.ne.s32.totalorder %s43, %s45
      %p49 = scmp.eq.s32.totalorder %s9, 0
      %p50 = por %p48, %p49
      %p51 = scmp.ne.s32.totalorder %s43, %s45
      %p52 = scmp.eq.s32.totalorder %s14, 3
      %p53 = por %p51, %p52
      %p54 = scmp.ne.s32.totalorder %s45, %s46
      %p55 = scmp.eq.s32.totalorder %s14, 0
      %p56 = por %p54, %p55
      %p57 = scmp.ne.s32.totalorder %s45, %s46
      %p58 = scmp.eq.s32.totalorder %s15, 3
      %p59 = por %p57, %p58
      %p61 = scmp.ne.s32.totalorder %s46, %s60
      %p62 = scmp.eq.s32.totalorder %s15, 0
      %p63 = por %p61, %p62
      %s65 = sadd.s32 %s64, 1
      %p68 = scmp.eq.s32.totalorder %s9, 3
      %p69 = scmp.ne.s32.totalorder %s64, %s66
      %p70 = scmp.eq.s32.totalorder %s9, 0
      %p71 = por %p69, %p70
      %p72 = scmp.ne.s32.totalorder %s64, %s66
      %p73 = scmp.eq.s32.totalorder %s14, 3
      %p74 = por %p72, %p73
      %p75 = scmp.ne.s32.totalorder %s66, %s67
      %p76 = scmp.eq.s32.totalorder %s14, 0
      %p77 = por %p75, %p76
      %p78 = scmp.ne.s32.totalorder %s66, %s67
      %p79 = scmp.eq.s32.totalorder %s15, 3
      %p80 = por %p78, %p79
      %p82 = scmp.ne.s32.totalorder %s67, %s81
      %p83 = scmp.eq.s32.totalorder %s15, 0
      %p84 = por %p82, %p83
      %p85 = scmp.le.s32.totalorder 1, %s9
      %p86 = scmp.lt.s32.totalorder %s9, 5
      %p87 = pnand %p85, %p86
      %p88 = pneg %p87
      // Predicated region
      $region9: #{simsiam_loss.1} parent=5 // pred_check
        _
      $region10: #{simsiam_loss.1} parent=5 // pred_check_branch
        %90 = sbr.rel (%p87) target = $region12
      $region11: #{simsiam_loss.1} parent=5 // pred_region
        %s91 = ssub.s32 %s9, 1
        // Predicated region
        $region13: #{simsiam_loss.1} parent=11 // pred_check
          %p92 = pneg %p56
        $region14: #{simsiam_loss.1} parent=11 // pred_check_branch
          %94 = sbr.rel (%p92) target = $region16
        $region15: #{simsiam_loss.1} parent=11 // pred_region
          _
        $region16: #{simsiam_loss.1} parent=11 // pred_fallthru
          _
      $region12: #{simsiam_loss.1} parent=5 // pred_fallthru
        _
      %p95 = scmp.lt.s32.totalorder %s9, 4
      // Predicated region
      $region17: #{simsiam_loss.1} parent=5 // pred_check
        %p96 = pneg %p95
      $region18: #{simsiam_loss.1} parent=5 // pred_check_branch
        %98 = sbr.rel (%p96) target = $region20
      $region19: #{simsiam_loss.1} parent=5 // pred_region
        // Predicated region
        $region21: #{simsiam_loss.1} parent=19 // pred_check
          %p99 = pneg %p29
        $region22: #{simsiam_loss.1} parent=19 // pred_check_branch
          %101 = sbr.rel (%p99) target = $region24
        $region23: #{simsiam_loss.1} parent=19 // pred_region
          %s102 = smul.u32 32, %s9
          %p103 = scmp.lt.s32.totalorder %s102, 127
          %s104 = scalar_select %p103, %s102, 127
          %s105 = smul.addr %s104, 8
          %s106 = scalar_lea.vmem %s0, %s105
          %s107 = smul.u32 32, %s9
        $region24: #{simsiam_loss.1} parent=19 // pred_fallthru
          _
      $region20: #{simsiam_loss.1} parent=5 // pred_fallthru
        _
      %p108 = scmp.le.s32.totalorder 1, %s9
      %p109 = scmp.lt.s32.totalorder %s9, 5
      %p110 = pnand %p108, %p109
      %p111 = pneg %p110
      // Predicated region
      $region25: #{simsiam_loss.1} parent=5 // pred_check
        _
      $region26: #{simsiam_loss.1} parent=5 // pred_check_branch
        %113 = sbr.rel (%p110) target = $region28
      $region27: #{simsiam_loss.1} parent=5 // pred_region
        %s114 = ssub.s32 %s9, 1
        %s115 = smul.u32 32, %s14
        %p116 = scmp.lt.s32.totalorder %s115, 127
        %s117 = scalar_select %p116, %s115, 127
        %s118 = smul.addr %s117, 8
        %s119 = scalar_lea.vmem %s0, %s118
        %p120 = pneg %p35
        %p121 = pneg %p32
        %p122 = pneg %p56
        %p123 = pneg %p53
        %p124 = pneg %p77
        %p125 = pneg %p74
        %s126 = smul.u32 32, %s14
        %p127 = scmp.lt.s32.totalorder %s126, 127
        %s128 = scalar_select %p127, %s126, 127
        %s129 = smul.addr %s128, 8
        %s130 = scalar_lea.vmem %s0, %s129
        %s131 = smul.u32 32, %s14
        %p132 = scmp.eq.s32.totalorder %s14, 0
        // Predicated region
        $region29: #{simsiam_loss.1} parent=27 // pred_check
          %p133 = pneg %p132
        $region30: #{simsiam_loss.1} parent=27 // pred_check_branch
          %135 = sbr.rel (%p133) target = $region32
        $region31: #{simsiam_loss.1} parent=27 // pred_region
          %136 = vst [vmem:[#allocation2] sm:$0xf] 0.0
        $region32: #{simsiam_loss.1} parent=27 // pred_fallthru
          _
        %v137 = vld [vmem:[%s1] sm:$0xff]
        %v138 = vld [vmem:[%s1 + $0x8] sm:$0xff]
        %v139 = vld [vmem:[%s1 + $0x10] sm:$0xff]
        %v140 = vld [vmem:[%s1 + $0x18] sm:$0xff]
        %v141 = vld [vmem:[%s1 + $0x20] sm:$0xff]
        %v142 = vld [vmem:[%s1 + $0x28] sm:$0xff]
        %v143 = vld [vmem:[%s1 + $0x30] sm:$0xff]
        %v144 = vld [vmem:[%s1 + $0x38] sm:$0xff]
        %v145 = vld [vmem:[%s1 + $0x40] sm:$0xff]
        %v146 = vld [vmem:[%s1 + $0x48] sm:$0xff]
        %v147 = vld [vmem:[%s1 + $0x50] sm:$0xff]
        %v148 = vld [vmem:[%s1 + $0x58] sm:$0xff]
        %v149 = vld [vmem:[%s1 + $0x60] sm:$0xff]
        %v150 = vld [vmem:[%s1 + $0x68] sm:$0xff]
        %v151 = vld [vmem:[%s1 + $0x70] sm:$0xff]
        %v152 = vld [vmem:[%s1 + $0x78] sm:$0xff]
        %v153 = vld [vmem:[%s1 + $0x300] sm:$0x1]
        %v154 = vld [vmem:[%s130] sm:$0xff]
        %v155 = vld [vmem:[%s130 + $0x8] sm:$0xff]
        %v156 = vld [vmem:[%s130 + $0x10] sm:$0xff]
        %v157 = vld [vmem:[%s130 + $0x18] sm:$0xff]
        %v158 = vld [vmem:[%s130 + $0x20] sm:$0xff]
        %v159 = vld [vmem:[%s130 + $0x28] sm:$0xff]
        %v160 = vld [vmem:[%s130 + $0x30] sm:$0xff]
        %v161 = vld [vmem:[%s130 + $0x38] sm:$0xff]
        %v162 = vld [vmem:[%s130 + $0x40] sm:$0xff]
        %v163 = vld [vmem:[%s130 + $0x48] sm:$0xff]
        %v164 = vld [vmem:[%s130 + $0x50] sm:$0xff]
        %v165 = vld [vmem:[%s130 + $0x58] sm:$0xff]
        %v166 = vld [vmem:[%s130 + $0x60] sm:$0xff]
        %v167 = vld [vmem:[%s130 + $0x68] sm:$0xff]
        %v168 = vld [vmem:[%s130 + $0x70] sm:$0xff]
        %v169 = vld [vmem:[%s130 + $0x78] sm:$0xff]
        %v170 = vld [vmem:[%s130 + $0x80] sm:$0xff]
        %v171 = vld [vmem:[%s130 + $0x88] sm:$0xff]
        %v172 = vld [vmem:[%s130 + $0x90] sm:$0xff]
        %v173 = vld [vmem:[%s130 + $0x98] sm:$0xff]
        %v174 = vld [vmem:[%s130 + $0xa0] sm:$0xff]
        %v175 = vld [vmem:[%s130 + $0xa8] sm:$0xff]
        %v176 = vld [vmem:[%s130 + $0xb0] sm:$0xff]
        %v177 = vld [vmem:[%s130 + $0xb8] sm:$0xff]
        %v178 = vld [vmem:[%s130 + $0xc0] sm:$0xff]
        %v179 = vld [vmem:[%s130 + $0xc8] sm:$0xff]
        %v180 = vld [vmem:[%s130 + $0xd0] sm:$0xff]
        %v181 = vld [vmem:[%s130 + $0xd8] sm:$0xff]
        %v182 = vld [vmem:[%s130 + $0xe0] sm:$0xff]
        %v183 = vld [vmem:[%s130 + $0xe8] sm:$0xff]
        %v184 = vld [vmem:[%s130 + $0xf0] sm:$0xff]
        %v185 = vld [vmem:[%s130 + $0xf8] sm:$0xff]
        %v186 = vlaneseq
        %v187 = vshrl.u32 %v186, 7
        %v188 = vsub.s32 0, %v187
        %v189 = vrot.slane %v153, %v188
        %190 = vmatprep.subr.mxu0 0.0
        %191 = vmatpush1.msra.mxu0 %v152
        %192 = vmatprep.subr.mxu0 0.0
        %193 = vmatpush1.msra.mxu0 %v151
        %194 = vmatprep.subr.mxu0 0.0
        %195 = vmatpush1.msra.mxu0 %v150
        %196 = vmatprep.subr.mxu0 0.0
        %197 = vmatpush1.msra.mxu0 %v149
        %198 = vmatprep.subr.mxu0 0.0
        %199 = vmatpush1.msra.mxu0 %v148
        %200 = vmatprep.subr.mxu0 0.0
        %201 = vmatpush1.msra.mxu0 %v147
        %202 = vmatprep.subr.mxu0 0.0
        %203 = vmatpush1.msra.mxu0 %v146
        %204 = vmatprep.subr.mxu0 0.0
        %205 = vmatpush1.msra.mxu0 %v145
        %206 = vmatprep.subr.mxu0 0.0
        %207 = vmatpush1.msra.mxu0 %v144
        %208 = vmatprep.subr.mxu0 0.0
        %209 = vmatpush1.msra.mxu0 %v143
        %210 = vmatprep.subr.mxu0 0.0
        %211 = vmatpush1.msra.mxu0 %v142
        %212 = vmatprep.subr.mxu0 0.0
        %213 = vmatpush1.msra.mxu0 %v141
        %214 = vmatprep.subr.mxu0 0.0
        %215 = vmatpush1.msra.mxu0 %v140
        %216 = vmatprep.subr.mxu0 0.0
        %217 = vmatpush1.msra.mxu0 %v139
        %218 = vmatprep.subr.mxu0 0.0
        %219 = vmatpush1.msra.mxu0 %v138
        %220 = vmatprep.subr.mxu0 0.0
        %221 = vmatpush1.msra.mxu0 %v137
        %222 = vmatprep.subr.mxu0 0.0
        %223 = vmatpush2.msra.mxu0 0.0
        %224 = vmatprep.subr.mxu0 0.0
        %225 = vmatpush2.msra.mxu0 0.0
        %226 = vmatprep.subr.mxu0 0.0
        %227 = vmatpush2.msra.mxu0 0.0
        %228 = vmatprep.subr.mxu0 0.0
        %229 = vmatpush2.msra.mxu0 0.0
        %230 = vmatprep.subr.mxu0 0.0
        %231 = vmatpush2.msra.mxu0 0.0
        %232 = vmatprep.subr.mxu0 0.0
        %233 = vmatpush2.msra.mxu0 0.0
        %234 = vmatprep.subr.mxu0 0.0
        %235 = vmatpush2.msra.mxu0 0.0
        %236 = vmatprep.subr.mxu0 0.0
        %237 = vmatpush2.msra.mxu0 0.0
        %238 = vmatprep.subr.mxu0 0.0
        %239 = vmatpush2.msra.mxu0 0.0
        %240 = vmatprep.subr.mxu0 0.0
        %241 = vmatpush2.msra.mxu0 0.0
        %242 = vmatprep.subr.mxu0 0.0
        %243 = vmatpush2.msra.mxu0 0.0
        %244 = vmatprep.subr.mxu0 0.0
        %245 = vmatpush2.msra.mxu0 0.0
        %246 = vmatprep.subr.mxu0 0.0
        %247 = vmatpush2.msra.mxu0 0.0
        %248 = vmatprep.subr.mxu0 0.0
        %249 = vmatpush2.msra.mxu0 0.0
        %250 = vmatprep.subr.mxu0 0.0
        %251 = vmatpush2.msra.mxu0 0.0
        %252 = vmatprep.subr.mxu0 0.0
        %253 = vmatpush2.msra.mxu0 0.0
        %254 = vmatprep.mubr.f32.mxu0 0.0
        %255 = vmatmul.mubr.f32.gmra.mxu0 %v154
        %v256 = vpop.f32.mrf.mxu0
        %v257 = vadd.f32 %v189, %v256
        %v258 = vpop.f32.mrf.mxu0
        %259 = vmatprep.mubr.f32.mxu0 0.0
        %260 = vmatmul.mubr.f32.gmra.mxu0 %v155
        %v261 = vpop.f32.mrf.mxu0
        %v262 = vadd.f32 %v189, %v261
        %v263 = vpop.f32.mrf.mxu0
        %264 = vmatprep.mubr.f32.mxu0 0.0
        %265 = vmatmul.mubr.f32.gmra.mxu0 %v156
        %v266 = vpop.f32.mrf.mxu0
        %v267 = vadd.f32 %v189, %v266
        %v268 = vpop.f32.mrf.mxu0
        %269 = vmatprep.mubr.f32.mxu0 0.0
        %270 = vmatmul.mubr.f32.gmra.mxu0 %v157
        %v271 = vpop.f32.mrf.mxu0
        %v272 = vadd.f32 %v189, %v271
        %v273 = vpop.f32.mrf.mxu0
        %274 = vmatprep.mubr.f32.mxu0 0.0
        %275 = vmatmul.mubr.f32.gmra.mxu0 %v158
        %v276 = vpop.f32.mrf.mxu0
        %v277 = vadd.f32 %v189, %v276
        %v278 = vpop.f32.mrf.mxu0
        %279 = vmatprep.mubr.f32.mxu0 0.0
        %280 = vmatmul.mubr.f32.gmra.mxu0 %v159
        %v281 = vpop.f32.mrf.mxu0
        %v282 = vadd.f32 %v189, %v281
        %v283 = vpop.f32.mrf.mxu0
        %284 = vmatprep.mubr.f32.mxu0 0.0
        %285 = vmatmul.mubr.f32.gmra.mxu0 %v160
        %v286 = vpop.f32.mrf.mxu0
        %v287 = vadd.f32 %v189, %v286
        %v288 = vpop.f32.mrf.mxu0
        %289 = vmatprep.mubr.f32.mxu0 0.0
        %290 = vmatmul.mubr.f32.gmra.mxu0 %v161
        %v291 = vpop.f32.mrf.mxu0
        %v292 = vadd.f32 %v189, %v291
        %v293 = vpop.f32.mrf.mxu0
        %294 = vmatprep.mubr.f32.mxu0 0.0
        %295 = vmatmul.mubr.f32.gmra.mxu0 %v162
        %v296 = vpop.f32.mrf.mxu0
        %v297 = vadd.f32 %v189, %v296
        %v298 = vpop.f32.mrf.mxu0
        %299 = vmatprep.mubr.f32.mxu0 0.0
        %300 = vmatmul.mubr.f32.gmra.mxu0 %v163
        %v301 = vpop.f32.mrf.mxu0
        %v302 = vadd.f32 %v189, %v301
        %v303 = vpop.f32.mrf.mxu0
        %304 = vmatprep.mubr.f32.mxu0 0.0
        %305 = vmatmul.mubr.f32.gmra.mxu0 %v164
        %v306 = vpop.f32.mrf.mxu0
        %v307 = vadd.f32 %v189, %v306
        %v308 = vpop.f32.mrf.mxu0
        %309 = vmatprep.mubr.f32.mxu0 0.0
        %310 = vmatmul.mubr.f32.gmra.mxu0 %v165
        %v311 = vpop.f32.mrf.mxu0
        %v312 = vadd.f32 %v189, %v311
        %v313 = vpop.f32.mrf.mxu0
        %314 = vmatprep.mubr.f32.mxu0 0.0
        %315 = vmatmul.mubr.f32.gmra.mxu0 %v166
        %v316 = vpop.f32.mrf.mxu0
        %v317 = vadd.f32 %v189, %v316
        %v318 = vpop.f32.mrf.mxu0
        %319 = vmatprep.mubr.f32.mxu0 0.0
        %320 = vmatmul.mubr.f32.gmra.mxu0 %v167
        %v321 = vpop.f32.mrf.mxu0
        %v322 = vadd.f32 %v189, %v321
        %v323 = vpop.f32.mrf.mxu0
        %324 = vmatprep.mubr.f32.mxu0 0.0
        %325 = vmatmul.mubr.f32.gmra.mxu0 %v168
        %v326 = vpop.f32.mrf.mxu0
        %v327 = vadd.f32 %v189, %v326
        %v328 = vpop.f32.mrf.mxu0
        %329 = vmatprep.mubr.f32.mxu0 0.0
        %330 = vmatmul.mubr.f32.gmra.mxu0 %v169
        %v331 = vpop.f32.mrf.mxu0
        %v332 = vadd.f32 %v189, %v331
        %v333 = vpop.f32.mrf.mxu0
        %334 = vmatprep.mubr.f32.mxu0 0.0
        %335 = vmatmul.mubr.f32.gmra.mxu0 %v170
        %v336 = vpop.f32.mrf.mxu0
        %v337 = vadd.f32 %v189, %v336
        %v338 = vpop.f32.mrf.mxu0
        %339 = vmatprep.mubr.f32.mxu0 0.0
        %340 = vmatmul.mubr.f32.gmra.mxu0 %v171
        %v341 = vpop.f32.mrf.mxu0
        %v342 = vadd.f32 %v189, %v341
        %v343 = vpop.f32.mrf.mxu0
        %344 = vmatprep.mubr.f32.mxu0 0.0
        %345 = vmatmul.mubr.f32.gmra.mxu0 %v172
        %v346 = vpop.f32.mrf.mxu0
        %v347 = vadd.f32 %v189, %v346
        %v348 = vpop.f32.mrf.mxu0
        %349 = vmatprep.mubr.f32.mxu0 0.0
        %350 = vmatmul.mubr.f32.gmra.mxu0 %v173
        %v351 = vpop.f32.mrf.mxu0
        %v352 = vadd.f32 %v189, %v351
        %v353 = vpop.f32.mrf.mxu0
        %354 = vmatprep.mubr.f32.mxu0 0.0
        %355 = vmatmul.mubr.f32.gmra.mxu0 %v174
        %v356 = vpop.f32.mrf.mxu0
        %v357 = vadd.f32 %v189, %v356
        %v358 = vpop.f32.mrf.mxu0
        %359 = vmatprep.mubr.f32.mxu0 0.0
        %360 = vmatmul.mubr.f32.gmra.mxu0 %v175
        %v361 = vpop.f32.mrf.mxu0
        %v362 = vadd.f32 %v189, %v361
        %v363 = vpop.f32.mrf.mxu0
        %364 = vmatprep.mubr.f32.mxu0 0.0
        %365 = vmatmul.mubr.f32.gmra.mxu0 %v176
        %v366 = vpop.f32.mrf.mxu0
        %v367 = vadd.f32 %v189, %v366
        %v368 = vpop.f32.mrf.mxu0
        %369 = vmatprep.mubr.f32.mxu0 0.0
        %370 = vmatmul.mubr.f32.gmra.mxu0 %v177
        %v371 = vpop.f32.mrf.mxu0
        %v372 = vadd.f32 %v189, %v371
        %v373 = vpop.f32.mrf.mxu0
        %374 = vmatprep.mubr.f32.mxu0 0.0
        %375 = vmatmul.mubr.f32.gmra.mxu0 %v178
        %v376 = vpop.f32.mrf.mxu0
        %v377 = vadd.f32 %v189, %v376
        %v378 = vpop.f32.mrf.mxu0
        %379 = vmatprep.mubr.f32.mxu0 0.0
        %380 = vmatmul.mubr.f32.gmra.mxu0 %v179
        %v381 = vpop.f32.mrf.mxu0
        %v382 = vadd.f32 %v189, %v381
        %v383 = vpop.f32.mrf.mxu0
        %384 = vmatprep.mubr.f32.mxu0 0.0
        %385 = vmatmul.mubr.f32.gmra.mxu0 %v180
        %v386 = vpop.f32.mrf.mxu0
        %v387 = vadd.f32 %v189, %v386
        %v388 = vpop.f32.mrf.mxu0
        %389 = vmatprep.mubr.f32.mxu0 0.0
        %390 = vmatmul.mubr.f32.gmra.mxu0 %v181
        %v391 = vpop.f32.mrf.mxu0
        %v392 = vadd.f32 %v189, %v391
        %v393 = vpop.f32.mrf.mxu0
        %394 = vmatprep.mubr.f32.mxu0 0.0
        %395 = vmatmul.mubr.f32.gmra.mxu0 %v182
        %v396 = vpop.f32.mrf.mxu0
        %v397 = vadd.f32 %v189, %v396
        %v398 = vpop.f32.mrf.mxu0
        %399 = vmatprep.mubr.f32.mxu0 0.0
        %400 = vmatmul.mubr.f32.gmra.mxu0 %v183
        %v401 = vpop.f32.mrf.mxu0
        %v402 = vadd.f32 %v189, %v401
        %v403 = vpop.f32.mrf.mxu0
        %404 = vmatprep.mubr.f32.mxu0 0.0
        %405 = vmatmul.mubr.f32.gmra.mxu0 %v184
        %v406 = vpop.f32.mrf.mxu0
        %v407 = vadd.f32 %v189, %v406
        %v408 = vpop.f32.mrf.mxu0
        %409 = vmatprep.mubr.f32.mxu0 0.0
        %410 = vmatmul.mubr.f32.gmra.mxu0 %v185
        %v411 = vpop.f32.mrf.mxu0
        %v412 = vadd.f32 %v189, %v411
        %v413 = vpop.f32.mrf.mxu0
        %414 = vdwg.mxu0
        %v415 = vmax.f32 %v257, 0.0
        %v416 = vmax.f32 %v262, 0.0
        %v417 = vmax.f32 %v267, 0.0
        %v418 = vmax.f32 %v272, 0.0
        %v419 = vmax.f32 %v277, 0.0
        %v420 = vmax.f32 %v282, 0.0
        %v421 = vmax.f32 %v287, 0.0
        %v422 = vmax.f32 %v292, 0.0
        %v423 = vmax.f32 %v297, 0.0
        %v424 = vmax.f32 %v302, 0.0
        %v425 = vmax.f32 %v307, 0.0
        %v426 = vmax.f32 %v312, 0.0
        %v427 = vmax.f32 %v317, 0.0
        %v428 = vmax.f32 %v322, 0.0
        %v429 = vmax.f32 %v327, 0.0
        %v430 = vmax.f32 %v332, 0.0
        %v431 = vmax.f32 %v337, 0.0
        %v432 = vmax.f32 %v342, 0.0
        %v433 = vmax.f32 %v347, 0.0
        %v434 = vmax.f32 %v352, 0.0
        %v435 = vmax.f32 %v357, 0.0
        %v436 = vmax.f32 %v362, 0.0
        %v437 = vmax.f32 %v367, 0.0
        %v438 = vmax.f32 %v372, 0.0
        %v439 = vmax.f32 %v377, 0.0
        %v440 = vmax.f32 %v382, 0.0
        %v441 = vmax.f32 %v387, 0.0
        %v442 = vmax.f32 %v392, 0.0
        %v443 = vmax.f32 %v397, 0.0
        %v444 = vmax.f32 %v402, 0.0
        %v445 = vmax.f32 %v407, 0.0
        %v446 = vmax.f32 %v412, 0.0
        %v447 = vadd.f32 %v415, %v416
        %v448 = vadd.f32 %v447, %v417
        %v449 = vadd.f32 %v448, %v418
        %v450 = vadd.f32 %v449, %v419
        %v451 = vadd.f32 %v450, %v420
        %v452 = vadd.f32 %v451, %v421
        %v453 = vadd.f32 %v452, %v422
        %v454 = vadd.f32 %v453, %v423
        %v455 = vadd.f32 %v454, %v424
        %v456 = vadd.f32 %v455, %v425
        %v457 = vadd.f32 %v456, %v426
        %v458 = vadd.f32 %v457, %v427
        %v459 = vadd.f32 %v458, %v428
        %v460 = vadd.f32 %v459, %v429
        %v461 = vadd.f32 %v460, %v430
        %v462 = vadd.f32 %v461, %v431
        %v463 = vadd.f32 %v462, %v432
        %v464 = vadd.f32 %v463, %v433
        %v465 = vadd.f32 %v464, %v434
        %v466 = vadd.f32 %v465, %v435
        %v467 = vadd.f32 %v466, %v436
        %v468 = vadd.f32 %v467, %v437
        %v469 = vadd.f32 %v468, %v438
        %v470 = vadd.f32 %v469, %v439
        %v471 = vadd.f32 %v470, %v440
        %v472 = vadd.f32 %v471, %v441
        %v473 = vadd.f32 %v472, %v442
        %v474 = vadd.f32 %v473, %v443
        %v475 = vadd.f32 %v474, %v444
        %v476 = vadd.f32 %v475, %v445
        %v477 = vadd.f32 %v476, %v446
        %v478 = vrot.slane %v477, 4
        %v479 = vadd.f32 %v477, %v478
        %v480 = vrot.slane %v479, 2
        %v481 = vadd.f32 %v479, %v480
        %v482 = vrot.slane %v481, 1
        %v483 = vadd.f32 %v481, %v482
        %v484 = vmul.f32 %v483, 0.00390625
        %v485 = vlaneseq
        %v486 = vshrl.u32 %v485, 7
        %v487 = vld [vmem:[#allocation2] sm:$0xf]
        %v488 = vstv %s14
        %vm489 = vcmp.eq.s32.totalorder %v486, %v488
        %v490 = vsel %vm489, 1, 0
        %vm491 = vcmp.eq.s32.totalorder %v490, 1
        %v492 = vsel %vm491, %v484, 0.0
        %v493 = vadd.f32 %v487, %v492
        %494 = vst [vmem:[#allocation2] sm:$0xf] %v493
        %p495 = scmp.eq.s32.totalorder %s14, 3
        // Predicated region
        $region33: #{simsiam_loss.1} parent=27 // pred_check
          %p496 = pneg %p495
        $region34: #{simsiam_loss.1} parent=27 // pred_check_branch
          %498 = sbr.rel (%p496) target = $region36
        $region35: #{simsiam_loss.1} parent=27 // pred_region
          %v499 = vld [vmem:[%s1 + $0x300] sm:$0xff]
          %v500 = vld [vmem:[%s1 + $0x308] sm:$0xff]
          %v501 = vld [vmem:[%s1 + $0x80] sm:$0xff]
          %v502 = vld [vmem:[%s1 + $0x88] sm:$0xff]
          %v503 = vld [vmem:[%s1 + $0x90] sm:$0xff]
          %v504 = vld [vmem:[%s1 + $0x98] sm:$0xff]
          %v505 = vld [vmem:[%s1 + $0xa0] sm:$0xff]
          %v506 = vld [vmem:[%s1 + $0xa8] sm:$0xff]
          %v507 = vld [vmem:[%s1 + $0xb0] sm:$0xff]
          %v508 = vld [vmem:[%s1 + $0xb8] sm:$0xff]
          %v509 = vld [vmem:[%s1 + $0xc0] sm:$0xff]
          %v510 = vld [vmem:[%s1 + $0xc8] sm:$0xff]
          %v511 = vld [vmem:[%s1 + $0xd0] sm:$0xff]
          %v512 = vld [vmem:[%s1 + $0xd8] sm:$0xff]
          %v513 = vld [vmem:[%s1 + $0xe0] sm:$0xff]
          %v514 = vld [vmem:[%s1 + $0xe8] sm:$0xff]
          %v515 = vld [vmem:[%s1 + $0xf0] sm:$0xff]
          %v516 = vld [vmem:[%s1 + $0xf8] sm:$0xff]
          %v517 = vld [vmem:[%s1 + $0x100] sm:$0xff]
          %v518 = vld [vmem:[%s1 + $0x108] sm:$0xff]
          %v519 = vld [vmem:[%s1 + $0x110] sm:$0xff]
          %v520 = vld [vmem:[%s1 + $0x118] sm:$0xff]
          %v521 = vld [vmem:[%s1 + $0x120] sm:$0xff]
          %v522 = vld [vmem:[%s1 + $0x128] sm:$0xff]
          %v523 = vld [vmem:[%s1 + $0x130] sm:$0xff]
          %v524 = vld [vmem:[%s1 + $0x138] sm:$0xff]
          %v525 = vld [vmem:[%s1 + $0x140] sm:$0xff]
          %v526 = vld [vmem:[%s1 + $0x148] sm:$0xff]
          %v527 = vld [vmem:[%s1 + $0x150] sm:$0xff]
          %v528 = vld [vmem:[%s1 + $0x158] sm:$0xff]
          %v529 = vld [vmem:[%s1 + $0x160] sm:$0xff]
          %v530 = vld [vmem:[%s1 + $0x168] sm:$0xff]
          %v531 = vld [vmem:[%s1 + $0x170] sm:$0xff]
          %v532 = vld [vmem:[%s1 + $0x178] sm:$0xff]
          %v533 = vld [vmem:[%s1 + $0x180] sm:$0xff]
          %v534 = vld [vmem:[%s1 + $0x188] sm:$0xff]
          %v535 = vld [vmem:[%s1 + $0x190] sm:$0xff]
          %v536 = vld [vmem:[%s1 + $0x198] sm:$0xff]
          %v537 = vld [vmem:[%s1 + $0x1a0] sm:$0xff]
          %v538 = vld [vmem:[%s1 + $0x1a8] sm:$0xff]
          %v539 = vld [vmem:[%s1 + $0x1b0] sm:$0xff]
          %v540 = vld [vmem:[%s1 + $0x1b8] sm:$0xff]
          %v541 = vld [vmem:[%s1 + $0x1c0] sm:$0xff]
          %v542 = vld [vmem:[%s1 + $0x1c8] sm:$0xff]
          %v543 = vld [vmem:[%s1 + $0x1d0] sm:$0xff]
          %v544 = vld [vmem:[%s1 + $0x1d8] sm:$0xff]
          %v545 = vld [vmem:[%s1 + $0x1e0] sm:$0xff]
          %v546 = vld [vmem:[%s1 + $0x1e8] sm:$0xff]
          %v547 = vld [vmem:[%s1 + $0x1f0] sm:$0xff]
          %v548 = vld [vmem:[%s1 + $0x1f8] sm:$0xff]
          %v549 = vld [vmem:[%s1 + $0x200] sm:$0xff]
          %v550 = vld [vmem:[%s1 + $0x208] sm:$0xff]
          %v551 = vld [vmem:[%s1 + $0x210] sm:$0xff]
          %v552 = vld [vmem:[%s1 + $0x218] sm:$0xff]
          %v553 = vld [vmem:[%s1 + $0x220] sm:$0xff]
          %v554 = vld [vmem:[%s1 + $0x228] sm:$0xff]
          %v555 = vld [vmem:[%s1 + $0x230] sm:$0xff]
          %v556 = vld [vmem:[%s1 + $0x238] sm:$0xff]
          %v557 = vld [vmem:[%s1 + $0x240] sm:$0xff]
          %v558 = vld [vmem:[%s1 + $0x248] sm:$0xff]
          %v559 = vld [vmem:[%s1 + $0x250] sm:$0xff]
          %v560 = vld [vmem:[%s1 + $0x258] sm:$0xff]
          %v561 = vld [vmem:[%s1 + $0x260] sm:$0xff]
          %v562 = vld [vmem:[%s1 + $0x268] sm:$0xff]
          %v563 = vld [vmem:[%s1 + $0x270] sm:$0xff]
          %v564 = vld [vmem:[%s1 + $0x278] sm:$0xff]
          %v565 = vld [vmem:[%s1 + $0x280] sm:$0xff]
          %v566 = vld [vmem:[%s1 + $0x288] sm:$0xff]
          %v567 = vld [vmem:[%s1 + $0x290] sm:$0xff]
          %v568 = vld [vmem:[%s1 + $0x298] sm:$0xff]
          %v569 = vld [vmem:[%s1 + $0x2a0] sm:$0xff]
          %v570 = vld [vmem:[%s1 + $0x2a8] sm:$0xff]
          %v571 = vld [vmem:[%s1 + $0x2b0] sm:$0xff]
          %v572 = vld [vmem:[%s1 + $0x2b8] sm:$0xff]
          %v573 = vld [vmem:[%s1 + $0x2c0] sm:$0xff]
          %v574 = vld [vmem:[%s1 + $0x2c8] sm:$0xff]
          %v575 = vld [vmem:[%s1 + $0x2d0] sm:$0xff]
          %v576 = vld [vmem:[%s1 + $0x2d8] sm:$0xff]
          %v577 = vld [vmem:[%s1 + $0x2e0] sm:$0xff]
          %v578 = vld [vmem:[%s1 + $0x2e8] sm:$0xff]
          %v579 = vld [vmem:[%s1 + $0x2f0] sm:$0xff]
          %v580 = vld [vmem:[%s1 + $0x2f8] sm:$0xff]
          %v581 = vld [vmem:[#allocation2] sm:$0xf]
          %vm582 = vcmp.lt.s32.totalorder %v486, 0
          %v583 = vsub.s32 0, %v486
          %v584 = vsel %vm582, %v583, %v486
          %v585 = vshrl.u32 %v584, 1
          %v586 = vand.u32 %v584, 1
          %v587 = vsub.s32 0, %v586
          %v588 = vsel %vm582, %v587, %v586
          %vm589 = vcmp.ne.s32.totalorder %v588, 0
          %vm590 = vcmp.lt.s32.totalorder %v588, 0
          %vm591 = vmand %vm590, %vm589
          %v592 = vadd.s32 %v588, 2
          %v593 = vsel %vm591, %v592, %v588
          %vm594 = vcmp.eq.s32.totalorder %v593, 0
          %v595 = vlaneseq
          %v596 = vshrl.u32 %v595, 7
          %v597 = vsub.s32 1, %v596
          %v598 = vrot.slane %v499, %v597
          %599 = vmatprep.subr.mxu0 0.0
          %600 = vmatpush1.msra.mxu0 %v516
          %601 = vmatprep.subr.mxu0 0.0
          %602 = vmatpush1.msra.mxu0 %v515
          %603 = vmatprep.subr.mxu0 0.0
          %604 = vmatpush1.msra.mxu0 %v514
          %605 = vmatprep.subr.mxu0 0.0
          %606 = vmatpush1.msra.mxu0 %v513
          %607 = vmatprep.subr.mxu0 0.0
          %608 = vmatpush1.msra.mxu0 %v512
          %609 = vmatprep.subr.mxu0 0.0
          %610 = vmatpush1.msra.mxu0 %v511
          %611 = vmatprep.subr.mxu0 0.0
          %612 = vmatpush1.msra.mxu0 %v510
          %613 = vmatprep.subr.mxu0 0.0
          %614 = vmatpush1.msra.mxu0 %v509
          %615 = vmatprep.subr.mxu0 0.0
          %616 = vmatpush1.msra.mxu0 %v508
          %617 = vmatprep.subr.mxu0 0.0
          %618 = vmatpush1.msra.mxu0 %v507
          %619 = vmatprep.subr.mxu0 0.0
          %620 = vmatpush1.msra.mxu0 %v506
          %621 = vmatprep.subr.mxu0 0.0
          %622 = vmatpush1.msra.mxu0 %v505
          %623 = vmatprep.subr.mxu0 0.0
          %624 = vmatpush1.msra.mxu0 %v504
          %625 = vmatprep.subr.mxu0 0.0
          %626 = vmatpush1.msra.mxu0 %v503
          %627 = vmatprep.subr.mxu0 0.0
          %628 = vmatpush1.msra.mxu0 %v502
          %629 = vmatprep.subr.mxu0 0.0
          %630 = vmatpush1.msra.mxu0 %v501
          %631 = vmatprep.subr.mxu0 0.0
          %632 = vmatpush2.msra.mxu0 0.0
          %633 = vmatprep.subr.mxu0 0.0
          %634 = vmatpush2.msra.mxu0 0.0
          %635 = vmatprep.subr.mxu0 0.0
          %636 = vmatpush2.msra.mxu0 0.0
          %637 = vmatprep.subr.mxu0 0.0
          %638 = vmatpush2.msra.mxu0 0.0
          %639 = vmatprep.subr.mxu0 0.0
          %640 = vmatpush2.msra.mxu0 0.0
          %641 = vmatprep.subr.mxu0 0.0
          %642 = vmatpush2.msra.mxu0 0.0
          %643 = vmatprep.subr.mxu0 0.0
          %644 = vmatpush2.msra.mxu0 0.0
          %645 = vmatprep.subr.mxu0 0.0
          %646 = vmatpush2.msra.mxu0 0.0
          %647 = vmatprep.subr.mxu0 0.0
          %648 = vmatpush2.msra.mxu0 0.0
          %649 = vmatprep.subr.mxu0 0.0
          %650 = vmatpush2.msra.mxu0 0.0
          %651 = vmatprep.subr.mxu0 0.0
          %652 = vmatpush2.msra.mxu0 0.0
          %653 = vmatprep.subr.mxu0 0.0
          %654 = vmatpush2.msra.mxu0 0.0
          %655 = vmatprep.subr.mxu0 0.0
          %656 = vmatpush2.msra.mxu0 0.0
          %657 = vmatprep.subr.mxu0 0.0
          %658 = vmatpush2.msra.mxu0 0.0
          %659 = vmatprep.subr.mxu0 0.0
          %660 = vmatpush2.msra.mxu0 0.0
          %661 = vmatprep.subr.mxu0 0.0
          %662 = vmatpush2.msra.mxu0 0.0
          %663 = vmatprep.mubr.f32.mxu0 0.0
          %664 = vmatmul.mubr.f32.gmra.mxu0 %v581
          %v665 = vpop.f32.mrf.mxu0
          %v666 = vadd.f32 %v598, %v665
          %v667 = vpop.f32.mrf.mxu0
          %668 = vdwg.mxu0
          %v670 = vrot.slane %v666, 1
          %v672 = vrot.slane %v666, 5
          %vm674 = vcmask 1042432
          %v675 = vsel %vm674, %v670, %v672
          %v676 = vrot.slane %v666, 3
          %v678 = vrot.slane %v666, 7
          %vm680 = vcmask 1040384
          %v681 = vsel %vm680, %v676, %v678
          %v682 = vsel %vm594, 1, 0
          %vm683 = vcmp.eq.s32.totalorder %v682, 1
          %v684 = vsel %vm683, %v675, %v681
          %v685 = vadd.f32 %v666, %v684
          %v686 = vmul.f32 %v685, 0.5
          %v687 = vsub.f32 %v666, %v686
          %v688 = vmul.f32 %v687, %v687
          %v689 = vadd.f32 %v688, 1e-05
          %v690 = vrsqrt.pop %v689
          %v691 = vmul.f32 %v687, %v690
          %v692 = vlaneseq
          %v693 = vshrl.u32 %v692, 7
          %v694 = vsub.s32 2, %v693
          %v695 = vrot.slane %v499, %v694
          %v696 = vmul.f32 %v691, %v695
          %v697 = vlaneseq
          %v698 = vshrl.u32 %v697, 7
          %v699 = vsub.s32 3, %v698
          %v700 = vrot.slane %v499, %v699
          %v701 = vadd.f32 %v696, %v700
          %v702 = vmax.f32 %v701, 0.0
          %v703 = vlaneseq
          %v704 = vshrl.u32 %v703, 7
          %v705 = vsub.s32 4, %v704
          %v706 = vrot.slane %v499, %v705
          %707 = vmatprep.subr.mxu0 0.0
          %708 = vmatpush1.msra.mxu0 %v532
          %709 = vmatprep.subr.mxu0 0.0
          %710 = vmatpush1.msra.mxu0 %v531
          %711 = vmatprep.subr.mxu0 0.0
          %712 = vmatpush1.msra.mxu0 %v530
          %713 = vmatprep.subr.mxu0 0.0
          %714 = vmatpush1.msra.mxu0 %v529
          %715 = vmatprep.subr.mxu0 0.0
          %716 = vmatpush1.msra.mxu0 %v528
          %717 = vmatprep.subr.mxu0 0.0
          %718 = vmatpush1.msra.mxu0 %v527
          %719 = vmatprep.subr.mxu0 0.0
          %720 = vmatpush1.msra.mxu0 %v526
          %721 = vmatprep.subr.mxu0 0.0
          %722 = vmatpush1.msra.mxu0 %v525
          %723 = vmatprep.subr.mxu0 0.0
          %724 = vmatpush1.msra.mxu0 %v524
          %725 = vmatprep.subr.mxu0 0.0
          %726 = vmatpush1.msra.mxu0 %v523
          %727 = vmatprep.subr.mxu0 0.0
          %728 = vmatpush1.msra.mxu0 %v522
          %729 = vmatprep.subr.mxu0 0.0
          %730 = vmatpush1.msra.mxu0 %v521
          %731 = vmatprep.subr.mxu0 0.0
          %732 = vmatpush1.msra.mxu0 %v520
          %733 = vmatprep.subr.mxu0 0.0
          %734 = vmatpush1.msra.mxu0 %v519
          %735 = vmatprep.subr.mxu0 0.0
          %736 = vmatpush1.msra.mxu0 %v518
          %737 = vmatprep.subr.mxu0 0.0
          %738 = vmatpush1.msra.mxu0 %v517
          %739 = vmatprep.subr.mxu0 0.0
          %740 = vmatpush2.msra.mxu0 0.0
          %741 = vmatprep.subr.mxu0 0.0
          %742 = vmatpush2.msra.mxu0 0.0
          %743 = vmatprep.subr.mxu0 0.0
          %744 = vmatpush2.msra.mxu0 0.0
          %745 = vmatprep.subr.mxu0 0.0
          %746 = vmatpush2.msra.mxu0 0.0
          %747 = vmatprep.subr.mxu0 0.0
          %748 = vmatpush2.msra.mxu0 0.0
          %749 = vmatprep.subr.mxu0 0.0
          %750 = vmatpush2.msra.mxu0 0.0
          %751 = vmatprep.subr.mxu0 0.0
          %752 = vmatpush2.msra.mxu0 0.0
          %753 = vmatprep.subr.mxu0 0.0
          %754 = vmatpush2.msra.mxu0 0.0
          %755 = vmatprep.subr.mxu0 0.0
          %756 = vmatpush2.msra.mxu0 0.0
          %757 = vmatprep.subr.mxu0 0.0
          %758 = vmatpush2.msra.mxu0 0.0
          %759 = vmatprep.subr.mxu0 0.0
          %760 = vmatpush2.msra.mxu0 0.0
          %761 = vmatprep.subr.mxu0 0.0
          %762 = vmatpush2.msra.mxu0 0.0
          %763 = vmatprep.subr.mxu0 0.0
          %764 = vmatpush2.msra.mxu0 0.0
          %765 = vmatprep.subr.mxu0 0.0
          %766 = vmatpush2.msra.mxu0 0.0
          %767 = vmatprep.subr.mxu0 0.0
          %768 = vmatpush2.msra.mxu0 0.0
          %769 = vmatprep.subr.mxu0 0.0
          %770 = vmatpush2.msra.mxu0 0.0
          %771 = vmatprep.mubr.f32.mxu0 0.0
          %772 = vmatmul.mubr.f32.gmra.mxu0 %v702
          %v773 = vpop.f32.mrf.mxu0
          %v774 = vadd.f32 %v706, %v773
          %v775 = vpop.f32.mrf.mxu0
          %776 = vdwg.mxu0
          %v778 = vrot.slane %v774, 1
          %v780 = vrot.slane %v774, 5
          %v782 = vsel %vm674, %v778, %v780
          %v783 = vrot.slane %v774, 3
          %v785 = vrot.slane %v774, 7
          %v787 = vsel %vm680, %v783, %v785
          %v788 = vsel %vm683, %v782, %v787
          %v789 = vadd.f32 %v774, %v788
          %v790 = vmul.f32 %v789, 0.5
          %v791 = vsub.f32 %v774, %v790
          %v792 = vmul.f32 %v791, %v791
          %v793 = vadd.f32 %v792, 1e-05
          %v794 = vrsqrt.pop %v793
          %v795 = vmul.f32 %v791, %v794
          %v796 = vlaneseq
          %v797 = vshrl.u32 %v796, 7
          %v798 = vsub.s32 5, %v797
          %v799 = vrot.slane %v499, %v798
          %v800 = vmul.f32 %v795, %v799
          %v801 = vlaneseq
          %v802 = vshrl.u32 %v801, 7
          %v803 = vsub.s32 6, %v802
          %v804 = vrot.slane %v499, %v803
          %v805 = vadd.f32 %v800, %v804
          %v806 = vmax.f32 %v805, 0.0
          %v807 = vlaneseq
          %v808 = vshrl.u32 %v807, 7
          %v809 = vsub.s32 7, %v808
          %v810 = vrot.slane %v499, %v809
          %811 = vmatprep.subr.mxu0 0.0
          %812 = vmatpush1.msra.mxu0 %v548
          %813 = vmatprep.subr.mxu0 0.0
          %814 = vmatpush1.msra.mxu0 %v547
          %815 = vmatprep.subr.mxu0 0.0
          %816 = vmatpush1.msra.mxu0 %v546
          %817 = vmatprep.subr.mxu0 0.0
          %818 = vmatpush1.msra.mxu0 %v545
          %819 = vmatprep.subr.mxu0 0.0
          %820 = vmatpush1.msra.mxu0 %v544
          %821 = vmatprep.subr.mxu0 0.0
          %822 = vmatpush1.msra.mxu0 %v543
          %823 = vmatprep.subr.mxu0 0.0
          %824 = vmatpush1.msra.mxu0 %v542
          %825 = vmatprep.subr.mxu0 0.0
          %826 = vmatpush1.msra.mxu0 %v541
          %827 = vmatprep.subr.mxu0 0.0
          %828 = vmatpush1.msra.mxu0 %v540
          %829 = vmatprep.subr.mxu0 0.0
          %830 = vmatpush1.msra.mxu0 %v539
          %831 = vmatprep.subr.mxu0 0.0
          %832 = vmatpush1.msra.mxu0 %v538
          %833 = vmatprep.subr.mxu0 0.0
          %834 = vmatpush1.msra.mxu0 %v537
          %835 = vmatprep.subr.mxu0 0.0
          %836 = vmatpush1.msra.mxu0 %v536
          %837 = vmatprep.subr.mxu0 0.0
          %838 = vmatpush1.msra.mxu0 %v535
          %839 = vmatprep.subr.mxu0 0.0
          %840 = vmatpush1.msra.mxu0 %v534
          %841 = vmatprep.subr.mxu0 0.0
          %842 = vmatpush1.msra.mxu0 %v533
          %843 = vmatprep.subr.mxu0 0.0
          %844 = vmatpush2.msra.mxu0 0.0
          %845 = vmatprep.subr.mxu0 0.0
          %846 = vmatpush2.msra.mxu0 0.0
          %847 = vmatprep.subr.mxu0 0.0
          %848 = vmatpush2.msra.mxu0 0.0
          %849 = vmatprep.subr.mxu0 0.0
          %850 = vmatpush2.msra.mxu0 0.0
          %851 = vmatprep.subr.mxu0 0.0
          %852 = vmatpush2.msra.mxu0 0.0
          %853 = vmatprep.subr.mxu0 0.0
          %854 = vmatpush2.msra.mxu0 0.0
          %855 = vmatprep.subr.mxu0 0.0
          %856 = vmatpush2.msra.mxu0 0.0
          %857 = vmatprep.subr.mxu0 0.0
          %858 = vmatpush2.msra.mxu0 0.0
          %859 = vmatprep.subr.mxu0 0.0
          %860 = vmatpush2.msra.mxu0 0.0
          %861 = vmatprep.subr.mxu0 0.0
          %862 = vmatpush2.msra.mxu0 0.0
          %863 = vmatprep.subr.mxu0 0.0
          %864 = vmatpush2.msra.mxu0 0.0
          %865 = vmatprep.subr.mxu0 0.0
          %866 = vmatpush2.msra.mxu0 0.0
          %867 = vmatprep.subr.mxu0 0.0
          %868 = vmatpush2.msra.mxu0 0.0
          %869 = vmatprep.subr.mxu0 0.0
          %870 = vmatpush2.msra.mxu0 0.0
          %871 = vmatprep.subr.mxu0 0.0
          %872 = vmatpush2.msra.mxu0 0.0
          %873 = vmatprep.subr.mxu0 0.0
          %874 = vmatpush2.msra.mxu0 0.0
          %875 = vmatprep.mubr.f32.mxu0 0.0
          %876 = vmatmul.mubr.f32.gmra.mxu0 %v806
          %v877 = vpop.f32.mrf.mxu0
          %v878 = vadd.f32 %v810, %v877
          %v879 = vpop.f32.mrf.mxu0
          %880 = vdwg.mxu0
          %v882 = vrot.slane %v878, 1
          %v884 = vrot.slane %v878, 5
          %v886 = vsel %vm674, %v882, %v884
          %v887 = vrot.slane %v878, 3
          %v889 = vrot.slane %v878, 7
          %v891 = vsel %vm680, %v887, %v889
          %v892 = vsel %vm683, %v886, %v891
          %v893 = vadd.f32 %v878, %v892
          %v894 = vmul.f32 %v893, 0.5
          %v895 = vsub.f32 %v878, %v894
          %v896 = vmul.f32 %v895, %v895
          %v897 = vadd.f32 %v896, 1e-05
          %v898 = vrsqrt.pop %v897
          %v899 = vmul.f32 %v895, %v898
          %v900 = vlaneseq
          %v901 = vshrl.u32 %v900, 7
          %v902 = vsub.s32 0, %v901
          %v903 = vrot.slane %v500, %v902
          %v904 = vmul.f32 %v899, %v903
          %v905 = vlaneseq
          %v906 = vshrl.u32 %v905, 7
          %v907 = vsub.s32 1, %v906
          %v908 = vrot.slane %v500, %v907
          %v909 = vadd.f32 %v904, %v908
          %v910 = vlaneseq
          %v911 = vshrl.u32 %v910, 7
          %v912 = vsub.s32 2, %v911
          %v913 = vrot.slane %v500, %v912
          %914 = vmatprep.subr.mxu0 0.0
          %915 = vmatpush1.msra.mxu0 %v564
          %916 = vmatprep.subr.mxu0 0.0
          %917 = vmatpush1.msra.mxu0 %v563
          %918 = vmatprep.subr.mxu0 0.0
          %919 = vmatpush1.msra.mxu0 %v562
          %920 = vmatprep.subr.mxu0 0.0
          %921 = vmatpush1.msra.mxu0 %v561
          %922 = vmatprep.subr.mxu0 0.0
          %923 = vmatpush1.msra.mxu0 %v560
          %924 = vmatprep.subr.mxu0 0.0
          %925 = vmatpush1.msra.mxu0 %v559
          %926 = vmatprep.subr.mxu0 0.0
          %927 = vmatpush1.msra.mxu0 %v558
          %928 = vmatprep.subr.mxu0 0.0
          %929 = vmatpush1.msra.mxu0 %v557
          %930 = vmatprep.subr.mxu0 0.0
          %931 = vmatpush1.msra.mxu0 %v556
          %932 = vmatprep.subr.mxu0 0.0
          %933 = vmatpush1.msra.mxu0 %v555
          %934 = vmatprep.subr.mxu0 0.0
          %935 = vmatpush1.msra.mxu0 %v554
          %936 = vmatprep.subr.mxu0 0.0
          %937 = vmatpush1.msra.mxu0 %v553
          %938 = vmatprep.subr.mxu0 0.0
          %939 = vmatpush1.msra.mxu0 %v552
          %940 = vmatprep.subr.mxu0 0.0
          %941 = vmatpush1.msra.mxu0 %v551
          %942 = vmatprep.subr.mxu0 0.0
          %943 = vmatpush1.msra.mxu0 %v550
          %944 = vmatprep.subr.mxu0 0.0
          %945 = vmatpush1.msra.mxu0 %v549
          %946 = vmatprep.subr.mxu0 0.0
          %947 = vmatpush2.msra.mxu0 0.0
          %948 = vmatprep.subr.mxu0 0.0
          %949 = vmatpush2.msra.mxu0 0.0
          %950 = vmatprep.subr.mxu0 0.0
          %951 = vmatpush2.msra.mxu0 0.0
          %952 = vmatprep.subr.mxu0 0.0
          %953 = vmatpush2.msra.mxu0 0.0
          %954 = vmatprep.subr.mxu0 0.0
          %955 = vmatpush2.msra.mxu0 0.0
          %956 = vmatprep.subr.mxu0 0.0
          %957 = vmatpush2.msra.mxu0 0.0
          %958 = vmatprep.subr.mxu0 0.0
          %959 = vmatpush2.msra.mxu0 0.0
          %960 = vmatprep.subr.mxu0 0.0
          %961 = vmatpush2.msra.mxu0 0.0
          %962 = vmatprep.subr.mxu0 0.0
          %963 = vmatpush2.msra.mxu0 0.0
          %964 = vmatprep.subr.mxu0 0.0
          %965 = vmatpush2.msra.mxu0 0.0
          %966 = vmatprep.subr.mxu0 0.0
          %967 = vmatpush2.msra.mxu0 0.0
          %968 = vmatprep.subr.mxu0 0.0
          %969 = vmatpush2.msra.mxu0 0.0
          %970 = vmatprep.subr.mxu0 0.0
          %971 = vmatpush2.msra.mxu0 0.0
          %972 = vmatprep.subr.mxu0 0.0
          %973 = vmatpush2.msra.mxu0 0.0
          %974 = vmatprep.subr.mxu0 0.0
          %975 = vmatpush2.msra.mxu0 0.0
          %976 = vmatprep.subr.mxu0 0.0
          %977 = vmatpush2.msra.mxu0 0.0
          %978 = vmatprep.mubr.f32.mxu0 0.0
          %979 = vmatmul.mubr.f32.gmra.mxu0 %v909
          %v980 = vpop.f32.mrf.mxu0
          %v981 = vadd.f32 %v913, %v980
          %v982 = vpop.f32.mrf.mxu0
          %983 = vdwg.mxu0
          %v985 = vrot.slane %v981, 1
          %v987 = vrot.slane %v981, 5
          %v989 = vsel %vm674, %v985, %v987
          %v990 = vrot.slane %v981, 3
          %v992 = vrot.slane %v981, 7
          %v994 = vsel %vm680, %v990, %v992
          %v995 = vsel %vm683, %v989, %v994
          %v996 = vadd.f32 %v981, %v995
          %v997 = vmul.f32 %v996, 0.5
          %v998 = vsub.f32 %v981, %v997
          %v999 = vmul.f32 %v998, %v998
          %v1000 = vadd.f32 %v999, 1e-05
          %v1001 = vrsqrt.pop %v1000
          %v1002 = vmul.f32 %v998, %v1001
          %v1003 = vlaneseq
          %v1004 = vshrl.u32 %v1003, 7
          %v1005 = vsub.s32 3, %v1004
          %v1006 = vrot.slane %v500, %v1005
          %v1007 = vmul.f32 %v1002, %v1006
          %v1008 = vlaneseq
          %v1009 = vshrl.u32 %v1008, 7
          %v1010 = vsub.s32 4, %v1009
          %v1011 = vrot.slane %v500, %v1010
          %v1012 = vadd.f32 %v1007, %v1011
          %v1013 = vmax.f32 %v1012, 0.0
          %v1014 = vlaneseq
          %v1015 = vshrl.u32 %v1014, 7
          %v1016 = vsub.s32 5, %v1015
          %v1017 = vrot.slane %v500, %v1016
          %1018 = vmatprep.subr.mxu0 0.0
          %1019 = vmatpush1.msra.mxu0 %v580
          %1020 = vmatprep.subr.mxu0 0.0
          %1021 = vmatpush1.msra.mxu0 %v579
          %1022 = vmatprep.subr.mxu0 0.0
          %1023 = vmatpush1.msra.mxu0 %v578
          %1024 = vmatprep.subr.mxu0 0.0
          %1025 = vmatpush1.msra.mxu0 %v577
          %1026 = vmatprep.subr.mxu0 0.0
          %1027 = vmatpush1.msra.mxu0 %v576
          %1028 = vmatprep.subr.mxu0 0.0
          %1029 = vmatpush1.msra.mxu0 %v575
          %1030 = vmatprep.subr.mxu0 0.0
          %1031 = vmatpush1.msra.mxu0 %v574
          %1032 = vmatprep.subr.mxu0 0.0
          %1033 = vmatpush1.msra.mxu0 %v573
          %1034 = vmatprep.subr.mxu0 0.0
          %1035 = vmatpush1.msra.mxu0 %v572
          %1036 = vmatprep.subr.mxu0 0.0
          %1037 = vmatpush1.msra.mxu0 %v571
          %1038 = vmatprep.subr.mxu0 0.0
          %1039 = vmatpush1.msra.mxu0 %v570
          %1040 = vmatprep.subr.mxu0 0.0
          %1041 = vmatpush1.msra.mxu0 %v569
          %1042 = vmatprep.subr.mxu0 0.0
          %1043 = vmatpush1.msra.mxu0 %v568
          %1044 = vmatprep.subr.mxu0 0.0
          %1045 = vmatpush1.msra.mxu0 %v567
          %1046 = vmatprep.subr.mxu0 0.0
          %1047 = vmatpush1.msra.mxu0 %v566
          %1048 = vmatprep.subr.mxu0 0.0
          %1049 = vmatpush1.msra.mxu0 %v565
          %1050 = vmatprep.subr.mxu0 0.0
          %1051 = vmatpush2.msra.mxu0 0.0
          %1052 = vmatprep.subr.mxu0 0.0
          %1053 = vmatpush2.msra.mxu0 0.0
          %1054 = vmatprep.subr.mxu0 0.0
          %1055 = vmatpush2.msra.mxu0 0.0
          %1056 = vmatprep.subr.mxu0 0.0
          %1057 = vmatpush2.msra.mxu0 0.0
          %1058 = vmatprep.subr.mxu0 0.0
          %1059 = vmatpush2.msra.mxu0 0.0
          %1060 = vmatprep.subr.mxu0 0.0
          %1061 = vmatpush2.msra.mxu0 0.0
          %1062 = vmatprep.subr.mxu0 0.0
          %1063 = vmatpush2.msra.mxu0 0.0
          %1064 = vmatprep.subr.mxu0 0.0
          %1065 = vmatpush2.msra.mxu0 0.0
          %1066 = vmatprep.subr.mxu0 0.0
          %1067 = vmatpush2.msra.mxu0 0.0
          %1068 = vmatprep.subr.mxu0 0.0
          %1069 = vmatpush2.msra.mxu0 0.0
          %1070 = vmatprep.subr.mxu0 0.0
          %1071 = vmatpush2.msra.mxu0 0.0
          %1072 = vmatprep.subr.mxu0 0.0
          %1073 = vmatpush2.msra.mxu0 0.0
          %1074 = vmatprep.subr.mxu0 0.0
          %1075 = vmatpush2.msra.mxu0 0.0
          %1076 = vmatprep.subr.mxu0 0.0
          %1077 = vmatpush2.msra.mxu0 0.0
          %1078 = vmatprep.subr.mxu0 0.0
          %1079 = vmatpush2.msra.mxu0 0.0
          %1080 = vmatprep.subr.mxu0 0.0
          %1081 = vmatpush2.msra.mxu0 0.0
          %1082 = vmatprep.mubr.f32.mxu0 0.0
          %1083 = vmatmul.mubr.f32.gmra.mxu0 %v1013
          %v1084 = vpop.f32.mrf.mxu0
          %v1085 = vadd.f32 %v1017, %v1084
          %v1086 = vpop.f32.mrf.mxu0
          %1087 = vdwg.mxu0
          %v1089 = vrot.slane %v909, 2
          %v1091 = vrot.slane %v909, 6
          %vm1093 = vcmask 1041408
          %v1094 = vsel %vm1093, %v1089, %v1091
          %v1095 = vmul.f32 %v1085, %v1094
          %vm1096 = vcmask 1043456
          %v1097 = vsel %vm1096, %v1095, 0.0
          %1098 = vadd.xlane.f32.xlu0 %v1097
          %v1099 = vpop.xlane.xlu0 %1098
          %v1100 = vmul.f32 %v1085, %v1085
          %v1101 = vsel %vm1096, %v1100, 0.0
          %1102 = vadd.xlane.f32.xlu0 %v1101
          %v1103 = vpop.xlane.xlu0 %1102
          %v1104 = vmul.f32 %v1094, %v1094
          %v1105 = vsel %vm1096, %v1104, 0.0
          %1106 = vadd.xlane.f32.xlu0 %v1105
          %v1107 = vpop.xlane.xlu0 %1106
          %v1108 = vmul.f32 %v1103, %v1107
          %v1109 = vrsqrt.pop %v1108
          %v1110 = vmin.f32 %v1109, 1e+08
          %v1111 = vmul.f32 %v1099, %v1110
          %vm1112 = vcmask 3072
          %v1113 = vsel %vm1112, %v1111, 0.0
          %1114 = vadd.xlane.f32.xlu0 %v1113
          %v1115 = vpop.xlane.xlu0 %1114
          %v1116 = vrot.slane %v1115, 4
          %v1117 = vadd.f32 %v1115, %v1116
          %v1118 = vrot.slane %v1117, 2
          %v1119 = vadd.f32 %v1117, %v1118
          %v1120 = vrot.slane %v1119, 1
          %v1121 = vadd.f32 %v1119, %v1120
          %s1122 = vtos %v1121
          %s1123 = ssub.f32 0.0, %s1122
          %s1124 = smul.f32 %s1123, 0.25
          %s1125 = scalar_lea.smem [#allocation3], 0
          %1126 = sst [smem:[%s1125]] %s1124
        $region36: #{simsiam_loss.1} parent=27 // pred_fallthru
          _
        // Predicated region
        $region37: #{simsiam_loss.1} parent=27 // pred_check
          %p1127 = pneg %p74
        $region38: #{simsiam_loss.1} parent=27 // pred_check_branch
          %1129 = sbr.rel (%p1127) target = $region40
        $region39: #{simsiam_loss.1} parent=27 // pred_region
          %s1131 = ssub.s32 16, 16
          %1132 = vsyncadd [#allocation4], %s1131
          %1135 = dma.smem_to_hbm [#allocation3], 16, %s2, [#allocation4]
        $region40: #{simsiam_loss.1} parent=27 // pred_fallthru
          _
        // Predicated region
        $region41: #{simsiam_loss.1} parent=27 // pred_check
          %p1136 = pneg %p74
        $region42: #{simsiam_loss.1} parent=27 // pred_check_branch
          %1138 = sbr.rel (%p1136) target = $region44
        $region43: #{simsiam_loss.1} parent=27 // pred_region
          %1139 = dma.done [#allocation4], 16
        $region44: #{simsiam_loss.1} parent=27 // pred_fallthru
          _
        %1140 = sfence
      $region28: #{simsiam_loss.1} parent=5 // pred_fallthru
        _
      %p1141 = scmp.le.s32.totalorder 2, %s9
      // Predicated region
      $region45: #{simsiam_loss.1} parent=5 // pred_check
        %p1142 = pneg %p1141
      $region46: #{simsiam_loss.1} parent=5 // pred_check_branch
        %1144 = sbr.rel (%p1142) target = $region48
      $region47: #{simsiam_loss.1} parent=5 // pred_region
        %s1145 = ssub.s32 %s9, 2
      $region48: #{simsiam_loss.1} parent=5 // pred_fallthru
        _
    $region6: #{simsiam_loss.1} parent=1 // loop_footer
      %s13 = sadd.s32 1, %s9
    $region7: #{simsiam_loss.1} parent=1 // loop_footer_branch
      %8 = sbr.rel target = $region3
    $region8: #{simsiam_loss.1} parent=1 // loop_exit
      _
    %1146 = vsyncpa [#allocation4], 1
    %s1147 = scalar_lea.sflag [#allocation4], 1
    %1148 = vsyncpa %s1147, 1

</llo_original>
